<compile_context>
chip_gen: v5e
topology: v5e:2x2
jax: 0.10.0
libtpu: 0.0.40
codegen_flags: <defaults>
</compile_context>

<pallas_src>
import functools

import jax
import jax.numpy as jnp
from jax import lax
from jax.experimental import pallas as pl
from jax.experimental.pallas import tpu as pltpu


def _round_up(x, m):
    return (x + m - 1) // m * m


@functools.partial(jax.jit, static_argnames=("stride", "bn_eps", "tf_mode"))
def effi_dws_conv_unit_forward(x, params, *, stride=1, bn_eps=1e-5, tf_mode=False):
    """EffiDwsConvUnit forward (inference-mode BN, ReLU activation).

    x:      [N, C, H, W] float32 (PyTorch NCHW layout).
    params: dict of conv / BN / SE parameters in PyTorch shapes.
    """
    N, C, H, W = x.shape
    w_dw = params["dw_w"]                                   # [C, 1, KH, KW]
    KH, KW = int(w_dw.shape[2]), int(w_dw.shape[3])
    OC = int(params["pw_w"].shape[0])
    mid = int(params["se_w1"].shape[0])

    residual = (C == OC) and (stride == 1)

    # The unit's convolutions are always stride-1; for a 3x3 kernel TF-"same"
    # padding (tf_mode=True) equals symmetric padding of 1, i.e. identical to
    # the non-tf branch, so both modes share one code path.
    pad = (KH - 1) // 2
    OH, OW = H, W
    Hp, Wp = H + 2 * pad, W + 2 * pad

    f32 = jnp.float32
    x_nhwc = jnp.transpose(x, (0, 2, 3, 1))                 # [N, H, W, C]
    x_pad = jnp.pad(x_nhwc, ((0, 0), (pad, pad), (pad, pad), (0, 0)))

    # ---- fold depthwise BN (eval mode) into the depthwise weights ----
    sc_dw = params["dw_bn_gamma"] / jnp.sqrt(params["dw_bn_var"] + bn_eps)        # [C]
    wdw_f = (w_dw.reshape(C, KH * KW).T * sc_dw[None, :]).astype(f32)             # [KH*KW, C]
    shdw = (params["dw_bn_beta"] - params["dw_bn_mean"] * sc_dw).reshape(1, C).astype(f32)

    # ---- SE 1x1-conv weights, laid out so both contractions reduce a ref axis ----
    w1_2d = params["se_w1"].reshape(mid, C).astype(f32)     # [mid, C]
    b1_col = params["se_b1"].reshape(mid, 1).astype(f32)    # [mid, 1]
    w2_2d = params["se_w2"].reshape(C, mid).T.astype(f32)   # [mid, C]
    b2_row = params["se_b2"].reshape(1, C).astype(f32)      # [1, C]

    # ---- fold pointwise BN scale into the pointwise weight, keep the shift ----
    sc_pw = params["pw_bn_gamma"] / jnp.sqrt(params["pw_bn_var"] + bn_eps)        # [OC]
    w_pw = params["pw_w"].reshape(OC, C).T * sc_pw[None, :]                       # [C, OC]
    sh_pw = (params["pw_bn_beta"] - params["pw_bn_mean"] * sc_pw).reshape(1, OC).astype(f32)

    # ---- tiling for the pointwise GEMM ----
    Mimg = OH * OW                                          # spatial rows per image
    TM = min(512, _round_up(Mimg, 8))                       # big M tile (amortize grid overhead)
    Mp = _round_up(Mimg, TM)
    Cp = _round_up(C, 128)                                  # GEMM K dim (lanes)
    OCp = _round_up(OC, 128)                                # MXU columns

    w_pw_p = jnp.pad(w_pw, ((0, Cp - C), (0, OCp - OC))).astype(jnp.bfloat16)     # [Cp, OCp]

    # --------- kernel 1: depthwise conv + BN + ReLU + SE (one image per step) ---------
    def dw_se_kernel(xp_ref, wdw_ref, shdw_ref, w1_ref, b1_ref, w2_ref, b2_ref,
                     act_ref, se_ref):
        # Depthwise 3x3 as shifted views of the halo-padded VMEM tile (no im2col).
        acc = jnp.zeros((OH, OW, C), jnp.float32)
        for kh in range(KH):
            for kw in range(KW):
                tap = xp_ref[0, kh:kh + OH, kw:kw + OW, :]          # (OH, OW, C)
                acc = acc + tap * wdw_ref[kh * KW + kw, :]          # per-channel weight
        act = jnp.maximum(acc + shdw_ref[...], 0.0)                 # BN shift + ReLU (f32)
        act2d = act.reshape(OH * OW, C)                             # (OW multiple of 8)

        # SE: global average pool + 2-layer MLP (ReLU, sigmoid), all in f32.
        mean = jnp.sum(act2d, axis=0, keepdims=True) * (1.0 / (OH * OW))          # (1, C)
        z1 = jnp.sum(mean * w1_ref[...], axis=1, keepdims=True) + b1_ref[...]     # (mid, 1)
        z1 = jnp.maximum(z1, 0.0)
        lg = jnp.sum(z1 * w2_ref[...], axis=0, keepdims=True) + b2_ref[...]       # (1, C)
        se = 1.0 / (1.0 + jnp.exp(-lg))

        # Write the bf16 activation slab the pointwise GEMM consumes; zero the
        # padded rows/lanes so they contribute exactly 0 to the matmul.
        act_ref[...] = jnp.zeros_like(act_ref)
        act_ref[0, :OH * OW, :C] = act2d.astype(act_ref.dtype)
        se_ref[...] = jnp.zeros_like(se_ref)
        se_ref[0, :, :C] = se

    cost_a = pl.CostEstimate(
        flops=2 * N * OH * OW * C * KH * KW,
        transcendentals=N * C,
        bytes_accessed=N * Hp * Wp * C * 4 + N * Mp * Cp * 2 + N * Cp * 4)

    act_p, se_p = pl.pallas_call(
        dw_se_kernel,
        out_shape=[jax.ShapeDtypeStruct((N, Mp, Cp), jnp.bfloat16),
                   jax.ShapeDtypeStruct((N, 1, Cp), jnp.float32)],
        grid_spec=pltpu.PrefetchScalarGridSpec(
            num_scalar_prefetch=0,
            grid=(N,),
            in_specs=[
                pl.BlockSpec((1, Hp, Wp, C), lambda n: (n, 0, 0, 0)),
                pl.BlockSpec((KH * KW, C), lambda n: (0, 0)),
                pl.BlockSpec((1, C), lambda n: (0, 0)),
                pl.BlockSpec((mid, C), lambda n: (0, 0)),
                pl.BlockSpec((mid, 1), lambda n: (0, 0)),
                pl.BlockSpec((mid, C), lambda n: (0, 0)),
                pl.BlockSpec((1, C), lambda n: (0, 0)),
            ],
            out_specs=[
                pl.BlockSpec((1, Mp, Cp), lambda n: (n, 0, 0)),
                pl.BlockSpec((1, 1, Cp), lambda n: (n, 0, 0)),
            ],
        ),
        compiler_params=pltpu.CompilerParams(
            dimension_semantics=("parallel",),
            vmem_limit_bytes=64 * 1024 * 1024),
        cost_estimate=cost_a,
    )(x_pad, wdw_f, shdw, w1_2d, b1_col, w2_2d, b2_row)

    # --------- kernel 2: pointwise 1x1 conv (bf16 GEMM) + BN + SE scale + residual ---------
    def pw_kernel(a_ref, se_ref, w_ref, sh_ref, *rest):
        if residual:
            id_ref, o_ref = rest
        else:
            (o_ref,) = rest
        lhs = a_ref[0].astype(jnp.float32) * se_ref[0]                # SE scale in f32
        acc = jnp.dot(lhs.astype(jnp.bfloat16), w_ref[...],
                      preferred_element_type=jnp.float32)             # (TM, OCp) f32
        y = acc[:, :OC] + sh_ref[...]                                 # folded-BN shift
        if residual:
            y = y + id_ref[0]
        o_ref[0] = y.astype(o_ref.dtype)

    in_specs_c = [
        pl.BlockSpec((1, TM, Cp), lambda n, m: (n, m, 0)),
        pl.BlockSpec((1, 1, Cp), lambda n, m: (n, 0, 0)),
        pl.BlockSpec((Cp, OCp), lambda n, m: (0, 0)),
        pl.BlockSpec((1, OC), lambda n, m: (0, 0)),
    ]
    args_c = [act_p, se_p, w_pw_p, sh_pw]
    bytes_c = N * Mp * Cp * 2 + Cp * OCp * 2 + N * Cp * 4 + OC * 4 + N * Mp * OC * 4
    if residual:
        ident = x_nhwc.reshape(N, Mimg, C)
        if Mp != Mimg:
            ident = jnp.pad(ident, ((0, 0), (0, Mp - Mimg), (0, 0)))
        in_specs_c.append(pl.BlockSpec((1, TM, C), lambda n, m: (n, m, 0)))
        args_c.append(ident)
        bytes_c += N * Mp * C * 4

    cost_c = pl.CostEstimate(flops=2 * N * Mp * Cp * OCp, transcendentals=0,
                             bytes_accessed=bytes_c)

    out = pl.pallas_call(
        pw_kernel,
        out_shape=jax.ShapeDtypeStruct((N, Mp, OC), jnp.float32),
        grid_spec=pltpu.PrefetchScalarGridSpec(
            num_scalar_prefetch=0,
            grid=(N, Mp // TM),
            in_specs=in_specs_c,
            out_specs=pl.BlockSpec((1, TM, OC), lambda n, m: (n, m, 0)),
        ),
        compiler_params=pltpu.CompilerParams(
            dimension_semantics=("parallel", "parallel"),
            vmem_limit_bytes=64 * 1024 * 1024),
        cost_estimate=cost_c,
    )(*args_c)

    # back to NCHW to match the PyTorch module
    y = out[:, :Mimg, :].reshape(N, OH, OW, OC)
    return jnp.transpose(y, (0, 3, 1, 2))


# ------------------------------ pure-JAX reference ------------------------------ #
def _reference(x, params, stride, bn_eps, tf_mode):
    N, C, H, W = x.shape
    OC = params["pw_w"].shape[0]
    mid = params["se_w1"].shape[0]
    # depthwise 3x3 (stride 1; pad 1 == TF-same for k=3,s=1) + BN + ReLU
    y = lax.conv_general_dilated(
        x, params["dw_w"], window_strides=(1, 1), padding=[(1, 1), (1, 1)],
        dimension_numbers=("NCHW", "OIHW", "NCHW"), feature_group_count=C)
    sc = params["dw_bn_gamma"] / jnp.sqrt(params["dw_bn_var"] + bn_eps)
    sh = params["dw_bn_beta"] - params["dw_bn_mean"] * sc
    y = jnp.maximum(y * sc[None, :, None, None] + sh[None, :, None, None], 0.0)
    # SE block
    p = jnp.mean(y, axis=(2, 3))                                               # [N, C]
    z = jnp.maximum(p @ params["se_w1"].reshape(mid, C).T + params["se_b1"], 0.0)
    s = jax.nn.sigmoid(z @ params["se_w2"].reshape(C, mid).T + params["se_b2"])
    y = y * s[:, :, None, None]
    # pointwise 1x1 conv + BN (no activation)
    y2 = jnp.einsum("nchw,oc->nohw", y, params["pw_w"].reshape(OC, C))
    sc2 = params["pw_bn_gamma"] / jnp.sqrt(params["pw_bn_var"] + bn_eps)
    sh2 = params["pw_bn_beta"] - params["pw_bn_mean"] * sc2
    y2 = y2 * sc2[None, :, None, None] + sh2[None, :, None, None]
    if C == OC and stride == 1:
        y2 = y2 + x
    return y2


if __name__ == "__main__":
    key = jax.random.PRNGKey(0)
    ks = jax.random.split(key, 12)

    # EffiDwsConvUnit(in_channels=8, out_channels=8, stride=1, bn_eps=1e-5,
    #                 activation=ReLU, tf_mode=False)  -> residual branch active.
    N, C, H, W = 2, 8, 16, 16
    OC = 8
    stride, bn_eps, tf_mode = 1, 1e-5, False
    mid = C // 4                                            # SEBlock(reduction=4)

    x = jax.random.normal(ks[0], (N, C, H, W), jnp.float32)

    params = dict(
        dw_w=jax.random.normal(ks[1], (C, 1, 3, 3), jnp.float32) * (2.0 / 9.0) ** 0.5,
        dw_bn_gamma=1.0 + 0.2 * jax.random.normal(ks[2], (C,), jnp.float32),
        dw_bn_beta=0.1 * jax.random.normal(ks[3], (C,), jnp.float32),
        dw_bn_mean=0.1 * jax.random.normal(ks[4], (C,), jnp.float32),
        dw_bn_var=1.0 + 0.1 * jax.random.uniform(ks[5], (C,), jnp.float32),
        se_w1=jax.random.normal(ks[6], (mid, C, 1, 1), jnp.float32) * (1.0 / C) ** 0.5,
        se_b1=0.1 * jax.random.normal(ks[7], (mid,), jnp.float32),
        se_w2=jax.random.normal(ks[8], (C, mid, 1, 1), jnp.float32) * (1.0 / mid) ** 0.5,
        se_b2=0.1 * jax.random.normal(ks[9], (C,), jnp.float32),
        pw_w=jax.random.normal(ks[10], (OC, C, 1, 1), jnp.float32) * (2.0 / C) ** 0.5,
        pw_bn_gamma=1.0 + 0.2 * jax.random.normal(ks[11], (OC,), jnp.float32),
        pw_bn_beta=0.05 * jnp.ones((OC,), jnp.float32),
        pw_bn_mean=0.05 * jnp.ones((OC,), jnp.float32),
        pw_bn_var=jnp.ones((OC,), jnp.float32),
    )

    y = effi_dws_conv_unit_forward(x, params, stride=stride, bn_eps=bn_eps,
                                   tf_mode=tf_mode)
    y = jax.block_until_ready(y)

    y_ref = _reference(x, params, stride, bn_eps, tf_mode)
    assert y.shape == (N, OC, H, W)
    # bf16 GEMM operands (f32 accumulation) => compare at bf16-level tolerance.
    err = float(jnp.max(jnp.abs(y - y_ref)) / (jnp.max(jnp.abs(y_ref)) + 1e-6))
    assert err < 3e-2, f"relative max error too large: {err}"
    print("KERNEL_OK")
</pallas_src>

<mosaic_0001>
module attributes {stable_mosaic.version = 11 : i64} {
  func.func @pw_kernel(%arg0: i32, %arg1: i32, %arg2: memref<1x256x128xbf16, #tpu.memory_space<vmem>>, %arg3: memref<1x1x128xf32, #tpu.memory_space<vmem>>, %arg4: memref<128x128xbf16, #tpu.memory_space<vmem>>, %arg5: memref<1x8xf32, #tpu.memory_space<vmem>>, %arg6: memref<1x256x8xf32, #tpu.memory_space<vmem>>, %arg7: memref<1x256x8xf32, #tpu.memory_space<vmem>>) attributes {dimension_semantics = [#tpu.dimension_semantics<parallel>, #tpu.dimension_semantics<parallel>], iteration_bounds = array<i64: 2, 1>, scalar_prefetch = 0 : i64, scratch_operands = 0 : i64, tpu.core_type = #tpu.core_type<tc>, window_params = [{transform_indices = @transform_0, window_bounds = array<i64: 1, 256, 128>}, {transform_indices = @transform_1, window_bounds = array<i64: 1, 1, 128>}, {pipeline_mode = #tpu.pipeline_mode<synchronous>, transform_indices = @transform_2, window_bounds = array<i64: 128, 128>}, {pipeline_mode = #tpu.pipeline_mode<synchronous>, transform_indices = @transform_3, window_bounds = array<i64: 1, 8>}, {transform_indices = @transform_4, window_bounds = array<i64: 1, 256, 8>}, {transform_indices = @transform_5, window_bounds = array<i64: 1, 256, 8>}]} {
    %c0 = arith.constant 0 : index
    %c0_0 = arith.constant 0 : index
    %c0_1 = arith.constant 0 : index
    %0 = vector.load %arg2[%c0, %c0_0, %c0_1] : memref<1x256x128xbf16, #tpu.memory_space<vmem>>, vector<1x256x128xbf16>
    %1 = vector.shape_cast %0 : vector<1x256x128xbf16> to vector<256x128xbf16>
    %2 = arith.extf %1 : vector<256x128xbf16> to vector<256x128xf32>
    %c0_2 = arith.constant 0 : index
    %c0_3 = arith.constant 0 : index
    %c0_4 = arith.constant 0 : index
    %3 = vector.load %arg3[%c0_2, %c0_3, %c0_4] : memref<1x1x128xf32, #tpu.memory_space<vmem>>, vector<1x1x128xf32>
    %4 = vector.shape_cast %3 : vector<1x1x128xf32> to vector<1x128xf32>
    %5 = vector.broadcast %4 : vector<1x128xf32> to vector<256x128xf32>
    %6 = arith.mulf %2, %5 : vector<256x128xf32>
    %7 = arith.truncf %6 : vector<256x128xf32> to vector<256x128xbf16>
    %c0_5 = arith.constant 0 : index
    %c0_6 = arith.constant 0 : index
    %8 = vector.load %arg4[%c0_5, %c0_6] : memref<128x128xbf16, #tpu.memory_space<vmem>>, vector<128x128xbf16>
    %cst = arith.constant dense<0.000000e+00> : vector<256x128xf32>
    %9 = tpu.matmul %7, %8, %cst {dimension_numbers = #tpu.dot_dimension_numbers<[1], [0], [0], [1], [0, 0, 1, 1], [], []>} : vector<256x128xbf16>, vector<128x128xbf16>, vector<256x128xf32> -> vector<256x128xf32>
    %10 = vector.extract_strided_slice %9 {offsets = [0, 0], sizes = [256, 8], strides = [1, 1]} : vector<256x128xf32> to vector<256x8xf32>
    %c0_7 = arith.constant 0 : index
    %c0_8 = arith.constant 0 : index
    %11 = vector.load %arg5[%c0_7, %c0_8] : memref<1x8xf32, #tpu.memory_space<vmem>>, vector<1x8xf32>
    %12 = vector.broadcast %11 : vector<1x8xf32> to vector<256x8xf32>
    %13 = arith.addf %10, %12 : vector<256x8xf32>
    %c0_9 = arith.constant 0 : index
    %c0_10 = arith.constant 0 : index
    %c0_11 = arith.constant 0 : index
    %14 = vector.load %arg6[%c0_9, %c0_10, %c0_11] : memref<1x256x8xf32, #tpu.memory_space<vmem>>, vector<1x256x8xf32>
    %15 = vector.shape_cast %14 : vector<1x256x8xf32> to vector<256x8xf32>
    %16 = arith.addf %13, %15 : vector<256x8xf32>
    %c0_12 = arith.constant 0 : index
    %c0_13 = arith.constant 0 : index
    %c0_14 = arith.constant 0 : index
    %17 = vector.load %arg7[%c0_12, %c0_13, %c0_14] : memref<1x256x8xf32, #tpu.memory_space<vmem>>, vector<1x256x8xf32>
    %18 = vector.shape_cast %17 : vector<1x256x8xf32> to vector<256x8xf32>
    %19 = vector.shape_cast %16 : vector<256x8xf32> to vector<1x256x8xf32>
    tpu.vector_store %arg7[%c0_12, %c0_13, %c0_14], %19 {strides = array<i32>} : memref<1x256x8xf32, #tpu.memory_space<vmem>>, vector<1x256x8xf32>,
    return
  }
  func.func @transform_0(%arg0: i32, %arg1: i32) -> (i32, i32, i32) {
    %c0_i32 = arith.constant 0 : i32
    %c0_i32_0 = arith.constant 0 : i32
    return %arg0, %arg1, %c0_i32 : i32, i32, i32
  }
  func.func @transform_1(%arg0: i32, %arg1: i32) -> (i32, i32, i32) {
    %c0_i32 = arith.constant 0 : i32
    %c0_i32_0 = arith.constant 0 : i32
    %c0_i32_1 = arith.constant 0 : i32
    return %arg0, %c0_i32, %c0_i32_0 : i32, i32, i32
  }
  func.func @transform_2(%arg0: i32, %arg1: i32) -> (i32, i32) {
    %c0_i32 = arith.constant 0 : i32
    %c0_i32_0 = arith.constant 0 : i32
    %c0_i32_1 = arith.constant 0 : i32
    return %c0_i32, %c0_i32_0 : i32, i32
  }
  func.func @transform_3(%arg0: i32, %arg1: i32) -> (i32, i32) {
    %c0_i32 = arith.constant 0 : i32
    %c0_i32_0 = arith.constant 0 : i32
    %c0_i32_1 = arith.constant 0 : i32
    return %c0_i32, %c0_i32_0 : i32, i32
  }
  func.func @transform_4(%arg0: i32, %arg1: i32) -> (i32, i32, i32) {
    %c0_i32 = arith.constant 0 : i32
    %c0_i32_0 = arith.constant 0 : i32
    return %arg0, %arg1, %c0_i32 : i32, i32, i32
  }
  func.func @transform_5(%arg0: i32, %arg1: i32) -> (i32, i32, i32) {
    %c0_i32 = arith.constant 0 : i32
    %c0_i32_0 = arith.constant 0 : i32
    return %arg0, %arg1, %c0_i32 : i32, i32, i32
  }
}

module attributes {stable_mosaic.version = 11 : i64} {
  func.func @dw_se_kernel(%arg0: i32, %arg1: memref<1x18x18x8xf32, #tpu.memory_space<vmem>>, %arg2: memref<9x8xf32, #tpu.memory_space<vmem>>, %arg3: memref<1x8xf32, #tpu.memory_space<vmem>>, %arg4: memref<2x8xf32, #tpu.memory_space<vmem>>, %arg5: memref<2x1xf32, #tpu.memory_space<vmem>>, %arg6: memref<2x8xf32, #tpu.memory_space<vmem>>, %arg7: memref<1x8xf32, #tpu.memory_space<vmem>>, %arg8: memref<1x256x128xbf16, #tpu.memory_space<vmem>>, %arg9: memref<1x1x128xf32, #tpu.memory_space<vmem>>) attributes {dimension_semantics = [#tpu.dimension_semantics<parallel>], iteration_bounds = array<i64: 2>, scalar_prefetch = 0 : i64, scratch_operands = 0 : i64, tpu.core_type = #tpu.core_type<tc>, window_params = [{transform_indices = @transform_0, window_bounds = array<i64: 1, 18, 18, 8>}, {pipeline_mode = #tpu.pipeline_mode<synchronous>, transform_indices = @transform_1, window_bounds = array<i64: 9, 8>}, {pipeline_mode = #tpu.pipeline_mode<synchronous>, transform_indices = @transform_2, window_bounds = array<i64: 1, 8>}, {pipeline_mode = #tpu.pipeline_mode<synchronous>, transform_indices = @transform_3, window_bounds = array<i64: 2, 8>}, {pipeline_mode = #tpu.pipeline_mode<synchronous>, transform_indices = @transform_4, window_bounds = array<i64: 2, 1>}, {pipeline_mode = #tpu.pipeline_mode<synchronous>, transform_indices = @transform_5, window_bounds = array<i64: 2, 8>}, {pipeline_mode = #tpu.pipeline_mode<synchronous>, transform_indices = @transform_6, window_bounds = array<i64: 1, 8>}, {transform_indices = @transform_7, window_bounds = array<i64: 1, 256, 128>}, {transform_indices = @transform_8, window_bounds = array<i64: 1, 1, 128>}]} {
    %cst = arith.constant 0.000000e+00 : f32
    %0 = vector.broadcast %cst : f32 to vector<16x16x8xf32>
    %c0 = arith.constant 0 : index
    %c0_0 = arith.constant 0 : index
    %c0_1 = arith.constant 0 : index
    %c0_2 = arith.constant 0 : index
    %1 = vector.load %arg1[%c0, %c0_0, %c0_1, %c0_2] : memref<1x18x18x8xf32, #tpu.memory_space<vmem>>, vector<1x16x16x8xf32>
    %2 = vector.shape_cast %1 : vector<1x16x16x8xf32> to vector<16x16x8xf32>
    %c0_3 = arith.constant 0 : index
    %c0_4 = arith.constant 0 : index
    %3 = vector.load %arg2[%c0_3, %c0_4] : memref<9x8xf32, #tpu.memory_space<vmem>>, vector<1x8xf32>
    %4 = vector.shape_cast %3 : vector<1x8xf32> to vector<8xf32>
    %5 = vector.shape_cast %4 : vector<8xf32> to vector<1x1x8xf32>
    %6 = vector.broadcast %5 : vector<1x1x8xf32> to vector<16x16x8xf32>
    %7 = arith.mulf %2, %6 : vector<16x16x8xf32>
    %8 = arith.addf %0, %7 : vector<16x16x8xf32>
    %c0_5 = arith.constant 0 : index
    %c0_6 = arith.constant 0 : index
    %c1 = arith.constant 1 : index
    %c0_7 = arith.constant 0 : index
    %9 = vector.load %arg1[%c0_5, %c0_6, %c1, %c0_7] : memref<1x18x18x8xf32, #tpu.memory_space<vmem>>, vector<1x16x16x8xf32>
    %10 = vector.shape_cast %9 : vector<1x16x16x8xf32> to vector<16x16x8xf32>
    %c1_8 = arith.constant 1 : index
    %c0_9 = arith.constant 0 : index
    %11 = vector.load %arg2[%c1_8, %c0_9] : memref<9x8xf32, #tpu.memory_space<vmem>>, vector<1x8xf32>
    %12 = vector.shape_cast %11 : vector<1x8xf32> to vector<8xf32>
    %13 = vector.shape_cast %12 : vector<8xf32> to vector<1x1x8xf32>
    %14 = vector.broadcast %13 : vector<1x1x8xf32> to vector<16x16x8xf32>
    %15 = arith.mulf %10, %14 : vector<16x16x8xf32>
    %16 = arith.addf %8, %15 : vector<16x16x8xf32>
    %c0_10 = arith.constant 0 : index
    %c0_11 = arith.constant 0 : index
    %c2 = arith.constant 2 : index
    %c0_12 = arith.constant 0 : index
    %17 = vector.load %arg1[%c0_10, %c0_11, %c2, %c0_12] : memref<1x18x18x8xf32, #tpu.memory_space<vmem>>, vector<1x16x16x8xf32>
    %18 = vector.shape_cast %17 : vector<1x16x16x8xf32> to vector<16x16x8xf32>
    %c2_13 = arith.constant 2 : index
    %c0_14 = arith.constant 0 : index
    %19 = vector.load %arg2[%c2_13, %c0_14] : memref<9x8xf32, #tpu.memory_space<vmem>>, vector<1x8xf32>
    %20 = vector.shape_cast %19 : vector<1x8xf32> to vector<8xf32>
    %21 = vector.shape_cast %20 : vector<8xf32> to vector<1x1x8xf32>
    %22 = vector.broadcast %21 : vector<1x1x8xf32> to vector<16x16x8xf32>
    %23 = arith.mulf %18, %22 : vector<16x16x8xf32>
    %24 = arith.addf %16, %23 : vector<16x16x8xf32>
    %c0_15 = arith.constant 0 : index
    %c1_16 = arith.constant 1 : index
    %c0_17 = arith.constant 0 : index
    %c0_18 = arith.constant 0 : index
    %25 = vector.load %arg1[%c0_15, %c1_16, %c0_17, %c0_18] : memref<1x18x18x8xf32, #tpu.memory_space<vmem>>, vector<1x16x16x8xf32>
    %26 = vector.shape_cast %25 : vector<1x16x16x8xf32> to vector<16x16x8xf32>
    %c3 = arith.constant 3 : index
    %c0_19 = arith.constant 0 : index
    %27 = vector.load %arg2[%c3, %c0_19] : memref<9x8xf32, #tpu.memory_space<vmem>>, vector<1x8xf32>
    %28 = vector.shape_cast %27 : vector<1x8xf32> to vector<8xf32>
    %29 = vector.shape_cast %28 : vector<8xf32> to vector<1x1x8xf32>
    %30 = vector.broadcast %29 : vector<1x1x8xf32> to vector<16x16x8xf32>
    %31 = arith.mulf %26, %30 : vector<16x16x8xf32>
    %32 = arith.addf %24, %31 : vector<16x16x8xf32>
    %c0_20 = arith.constant 0 : index
    %c1_21 = arith.constant 1 : index
    %c1_22 = arith.constant 1 : index
    %c0_23 = arith.constant 0 : index
    %33 = vector.load %arg1[%c0_20, %c1_21, %c1_22, %c0_23] : memref<1x18x18x8xf32, #tpu.memory_space<vmem>>, vector<1x16x16x8xf32>
    %34 = vector.shape_cast %33 : vector<1x16x16x8xf32> to vector<16x16x8xf32>
    %c4 = arith.constant 4 : index
    %c0_24 = arith.constant 0 : index
    %35 = vector.load %arg2[%c4, %c0_24] : memref<9x8xf32, #tpu.memory_space<vmem>>, vector<1x8xf32>
    %36 = vector.shape_cast %35 : vector<1x8xf32> to vector<8xf32>
    %37 = vector.shape_cast %36 : vector<8xf32> to vector<1x1x8xf32>
    %38 = vector.broadcast %37 : vector<1x1x8xf32> to vector<16x16x8xf32>
    %39 = arith.mulf %34, %38 : vector<16x16x8xf32>
    %40 = arith.addf %32, %39 : vector<16x16x8xf32>
    %c0_25 = arith.constant 0 : index
    %c1_26 = arith.constant 1 : index
    %c2_27 = arith.constant 2 : index
    %c0_28 = arith.constant 0 : index
    %41 = vector.load %arg1[%c0_25, %c1_26, %c2_27, %c0_28] : memref<1x18x18x8xf32, #tpu.memory_space<vmem>>, vector<1x16x16x8xf32>
    %42 = vector.shape_cast %41 : vector<1x16x16x8xf32> to vector<16x16x8xf32>
    %c5 = arith.constant 5 : index
    %c0_29 = arith.constant 0 : index
    %43 = vector.load %arg2[%c5, %c0_29] : memref<9x8xf32, #tpu.memory_space<vmem>>, vector<1x8xf32>
    %44 = vector.shape_cast %43 : vector<1x8xf32> to vector<8xf32>
    %45 = vector.shape_cast %44 : vector<8xf32> to vector<1x1x8xf32>
    %46 = vector.broadcast %45 : vector<1x1x8xf32> to vector<16x16x8xf32>
    %47 = arith.mulf %42, %46 : vector<16x16x8xf32>
    %48 = arith.addf %40, %47 : vector<16x16x8xf32>
    %c0_30 = arith.constant 0 : index
    %c2_31 = arith.constant 2 : index
    %c0_32 = arith.constant 0 : index
    %c0_33 = arith.constant 0 : index
    %49 = vector.load %arg1[%c0_30, %c2_31, %c0_32, %c0_33] : memref<1x18x18x8xf32, #tpu.memory_space<vmem>>, vector<1x16x16x8xf32>
    %50 = vector.shape_cast %49 : vector<1x16x16x8xf32> to vector<16x16x8xf32>
    %c6 = arith.constant 6 : index
    %c0_34 = arith.constant 0 : index
    %51 = vector.load %arg2[%c6, %c0_34] : memref<9x8xf32, #tpu.memory_space<vmem>>, vector<1x8xf32>
    %52 = vector.shape_cast %51 : vector<1x8xf32> to vector<8xf32>
    %53 = vector.shape_cast %52 : vector<8xf32> to vector<1x1x8xf32>
    %54 = vector.broadcast %53 : vector<1x1x8xf32> to vector<16x16x8xf32>
    %55 = arith.mulf %50, %54 : vector<16x16x8xf32>
    %56 = arith.addf %48, %55 : vector<16x16x8xf32>
    %c0_35 = arith.constant 0 : index
    %c2_36 = arith.constant 2 : index
    %c1_37 = arith.constant 1 : index
    %c0_38 = arith.constant 0 : index
    %57 = vector.load %arg1[%c0_35, %c2_36, %c1_37, %c0_38] : memref<1x18x18x8xf32, #tpu.memory_space<vmem>>, vector<1x16x16x8xf32>
    %58 = vector.shape_cast %57 : vector<1x16x16x8xf32> to vector<16x16x8xf32>
    %c7 = arith.constant 7 : index
    %c0_39 = arith.constant 0 : index
    %59 = vector.load %arg2[%c7, %c0_39] : memref<9x8xf32, #tpu.memory_space<vmem>>, vector<1x8xf32>
    %60 = vector.shape_cast %59 : vector<1x8xf32> to vector<8xf32>
    %61 = vector.shape_cast %60 : vector<8xf32> to vector<1x1x8xf32>
    %62 = vector.broadcast %61 : vector<1x1x8xf32> to vector<16x16x8xf32>
    %63 = arith.mulf %58, %62 : vector<16x16x8xf32>
    %64 = arith.addf %56, %63 : vector<16x16x8xf32>
    %c0_40 = arith.constant 0 : index
    %c2_41 = arith.constant 2 : index
    %c2_42 = arith.constant 2 : index
    %c0_43 = arith.constant 0 : index
    %65 = vector.load %arg1[%c0_40, %c2_41, %c2_42, %c0_43] : memref<1x18x18x8xf32, #tpu.memory_space<vmem>>, vector<1x16x16x8xf32>
    %66 = vector.shape_cast %65 : vector<1x16x16x8xf32> to vector<16x16x8xf32>
    %c8 = arith.constant 8 : index
    %c0_44 = arith.constant 0 : index
    %67 = vector.load %arg2[%c8, %c0_44] : memref<9x8xf32, #tpu.memory_space<vmem>>, vector<1x8xf32>
    %68 = vector.shape_cast %67 : vector<1x8xf32> to vector<8xf32>
    %69 = vector.shape_cast %68 : vector<8xf32> to vector<1x1x8xf32>
    %70 = vector.broadcast %69 : vector<1x1x8xf32> to vector<16x16x8xf32>
    %71 = arith.mulf %66, %70 : vector<16x16x8xf32>
    %72 = arith.addf %64, %71 : vector<16x16x8xf32>
    %c0_45 = arith.constant 0 : index
    %c0_46 = arith.constant 0 : index
    %73 = vector.load %arg3[%c0_45, %c0_46] : memref<1x8xf32, #tpu.memory_space<vmem>>, vector<1x8xf32>
    %74 = vector.shape_cast %73 : vector<1x8xf32> to vector<1x1x8xf32>
    %75 = vector.broadcast %74 : vector<1x1x8xf32> to vector<16x16x8xf32>
    %76 = arith.addf %72, %75 : vector<16x16x8xf32>
    %cst_47 = arith.constant 0.000000e+00 : f32
    %77 = vector.broadcast %cst_47 : f32 to vector<16x16x8xf32>
    %78 = arith.maximumf %76, %77 : vector<16x16x8xf32>
    %79 = vector.shape_cast %78 : vector<16x16x8xf32> to vector<256x8xf32>
    %cst_48 = arith.constant dense<0.000000e+00> : vector<8xf32>
    %80 = vector.multi_reduction <add>, %79, %cst_48 [0] : vector<256x8xf32> to vector<8xf32>
    %81 = vector.shape_cast %80 : vector<8xf32> to vector<1x8xf32>
    %cst_49 = arith.constant 3.906250e-03 : f32
    %82 = vector.broadcast %cst_49 : f32 to vector<1x8xf32>
    %83 = arith.mulf %81, %82 : vector<1x8xf32>
    %c0_50 = arith.constant 0 : index
    %c0_51 = arith.constant 0 : index
    %84 = vector.load %arg4[%c0_50, %c0_51] : memref<2x8xf32, #tpu.memory_space<vmem>>, vector<2x8xf32>
    %85 = vector.broadcast %83 : vector<1x8xf32> to vector<2x8xf32>
    %86 = arith.mulf %85, %84 : vector<2x8xf32>
    %cst_52 = arith.constant dense<0.000000e+00> : vector<2xf32>
    %87 = vector.multi_reduction <add>, %86, %cst_52 [1] : vector<2x8xf32> to vector<2xf32>
    %88 = vector.shape_cast %87 : vector<2xf32> to vector<2x1xf32>
    %c0_53 = arith.constant 0 : index
    %c0_54 = arith.constant 0 : index
    %89 = vector.load %arg5[%c0_53, %c0_54] : memref<2x1xf32, #tpu.memory_space<vmem>>, vector<2x1xf32>
    %90 = arith.addf %88, %89 : vector<2x1xf32>
    %cst_55 = arith.constant 0.000000e+00 : f32
    %91 = vector.broadcast %cst_55 : f32 to vector<2x1xf32>
    %92 = arith.maximumf %90, %91 : vector<2x1xf32>
    %c0_56 = arith.constant 0 : index
    %c0_57 = arith.constant 0 : index
    %93 = vector.load %arg6[%c0_56, %c0_57] : memref<2x8xf32, #tpu.memory_space<vmem>>, vector<2x8xf32>
    %94 = vector.broadcast %92 : vector<2x1xf32> to vector<2x8xf32>
    %95 = arith.mulf %94, %93 : vector<2x8xf32>
    %cst_58 = arith.constant dense<0.000000e+00> : vector<8xf32>
    %96 = vector.multi_reduction <add>, %95, %cst_58 [0] : vector<2x8xf32> to vector<8xf32>
    %97 = vector.shape_cast %96 : vector<8xf32> to vector<1x8xf32>
    %c0_59 = arith.constant 0 : index
    %c0_60 = arith.constant 0 : index
    %98 = vector.load %arg7[%c0_59, %c0_60] : memref<1x8xf32, #tpu.memory_space<vmem>>, vector<1x8xf32>
    %99 = arith.addf %97, %98 : vector<1x8xf32>
    %cst_61 = arith.constant 0.000000e+00 : f32
    %100 = vector.broadcast %cst_61 : f32 to vector<1x8xf32>
    %101 = arith.subf %100, %99 : vector<1x8xf32>
    %102 = math.exp %101 : vector<1x8xf32>
    %cst_62 = arith.constant 1.000000e+00 : f32
    %103 = vector.broadcast %cst_62 : f32 to vector<1x8xf32>
    %104 = arith.addf %103, %102 : vector<1x8xf32>
    %cst_63 = arith.constant 1.000000e+00 : f32
    %105 = vector.broadcast %cst_63 : f32 to vector<1x8xf32>
    %106 = arith.divf %105, %104 : vector<1x8xf32>
    %cst_64 = arith.constant 0.000000e+00 : bf16
    %107 = vector.broadcast %cst_64 : bf16 to vector<1x256x128xbf16>
    %c0_65 = arith.constant 0 : index
    %c0_66 = arith.constant 0 : index
    %c0_67 = arith.constant 0 : index
    %108 = vector.load %arg8[%c0_65, %c0_66, %c0_67] : memref<1x256x128xbf16, #tpu.memory_space<vmem>>, vector<1x256x128xbf16>
    tpu.vector_store %arg8[%c0_65, %c0_66, %c0_67], %107 {strides = array<i32>} : memref<1x256x128xbf16, #tpu.memory_space<vmem>>, vector<1x256x128xbf16>,
    %109 = arith.truncf %79 : vector<256x8xf32> to vector<256x8xbf16>
    %c0_68 = arith.constant 0 : index
    %c0_69 = arith.constant 0 : index
    %c0_70 = arith.constant 0 : index
    %110 = vector.load %arg8[%c0_68, %c0_69, %c0_70] : memref<1x256x128xbf16, #tpu.memory_space<vmem>>, vector<1x256x8xbf16>
    %111 = vector.shape_cast %110 : vector<1x256x8xbf16> to vector<256x8xbf16>
    %112 = vector.shape_cast %109 : vector<256x8xbf16> to vector<1x256x8xbf16>
    tpu.vector_store %arg8[%c0_68, %c0_69, %c0_70], %112 {strides = array<i32>} : memref<1x256x128xbf16, #tpu.memory_space<vmem>>, vector<1x256x8xbf16>,
    %cst_71 = arith.constant 0.000000e+00 : f32
    %113 = vector.broadcast %cst_71 : f32 to vector<1x1x128xf32>
    %c0_72 = arith.constant 0 : index
    %c0_73 = arith.constant 0 : index
    %c0_74 = arith.constant 0 : index
    %114 = vector.load %arg9[%c0_72, %c0_73, %c0_74] : memref<1x1x128xf32, #tpu.memory_space<vmem>>, vector<1x1x128xf32>
    tpu.vector_store %arg9[%c0_72, %c0_73, %c0_74], %113 {strides = array<i32>} : memref<1x1x128xf32, #tpu.memory_space<vmem>>, vector<1x1x128xf32>,
    %c0_75 = arith.constant 0 : index
    %c0_76 = arith.constant 0 : index
    %c0_77 = arith.constant 0 : index
    %115 = vector.load %arg9[%c0_75, %c0_76, %c0_77] : memref<1x1x128xf32, #tpu.memory_space<vmem>>, vector<1x1x8xf32>
    %116 = vector.shape_cast %115 : vector<1x1x8xf32> to vector<1x8xf32>
    %117 = vector.shape_cast %106 : vector<1x8xf32> to vector<1x1x8xf32>
    tpu.vector_store %arg9[%c0_75, %c0_76, %c0_77], %117 {strides = array<i32>} : memref<1x1x128xf32, #tpu.memory_space<vmem>>, vector<1x1x8xf32>,
    return
  }
  func.func @transform_0(%arg0: i32) -> (i32, i32, i32, i32) {
    %c0_i32 = arith.constant 0 : i32
    %c0_i32_0 = arith.constant 0 : i32
    %c0_i32_1 = arith.constant 0 : i32
    %c0_i32_2 = arith.constant 0 : i32
    return %arg0, %c0_i32, %c0_i32_0, %c0_i32_1 : i32, i32, i32, i32
  }
  func.func @transform_1(%arg0: i32) -> (i32, i32) {
    %c0_i32 = arith.constant 0 : i32
    %c0_i32_0 = arith.constant 0 : i32
    %c0_i32_1 = arith.constant 0 : i32
    return %c0_i32, %c0_i32_0 : i32, i32
  }
  func.func @transform_2(%arg0: i32) -> (i32, i32) {
    %c0_i32 = arith.constant 0 : i32
    %c0_i32_0 = arith.constant 0 : i32
    %c0_i32_1 = arith.constant 0 : i32
    return %c0_i32, %c0_i32_0 : i32, i32
  }
  func.func @transform_3(%arg0: i32) -> (i32, i32) {
    %c0_i32 = arith.constant 0 : i32
    %c0_i32_0 = arith.constant 0 : i32
    %c0_i32_1 = arith.constant 0 : i32
    return %c0_i32, %c0_i32_0 : i32, i32
  }
  func.func @transform_4(%arg0: i32) -> (i32, i32) {
    %c0_i32 = arith.constant 0 : i32
    %c0_i32_0 = arith.constant 0 : i32
    %c0_i32_1 = arith.constant 0 : i32
    return %c0_i32, %c0_i32_0 : i32, i32
  }
  func.func @transform_5(%arg0: i32) -> (i32, i32) {
    %c0_i32 = arith.constant 0 : i32
    %c0_i32_0 = arith.constant 0 : i32
    %c0_i32_1 = arith.constant 0 : i32
    return %c0_i32, %c0_i32_0 : i32, i32
  }
  func.func @transform_6(%arg0: i32) -> (i32, i32) {
    %c0_i32 = arith.constant 0 : i32
    %c0_i32_0 = arith.constant 0 : i32
    %c0_i32_1 = arith.constant 0 : i32
    return %c0_i32, %c0_i32_0 : i32, i32
  }
  func.func @transform_7(%arg0: i32) -> (i32, i32, i32) {
    %c0_i32 = arith.constant 0 : i32
    %c0_i32_0 = arith.constant 0 : i32
    %c0_i32_1 = arith.constant 0 : i32
    return %arg0, %c0_i32, %c0_i32_0 : i32, i32, i32
  }
  func.func @transform_8(%arg0: i32) -> (i32, i32, i32) {
    %c0_i32 = arith.constant 0 : i32
    %c0_i32_0 = arith.constant 0 : i32
    %c0_i32_1 = arith.constant 0 : i32
    return %arg0, %c0_i32, %c0_i32_0 : i32, i32, i32
  }
}

</mosaic_0001>

<llo_original>
// kernel: effi_dws_conv_unit_forward.3
$region0: #{effi_dws_conv_unit_forward.3}
  #allocation0 [shape = 'u32[]', space=smem, size = 0x4, offset = 0x4, fixed_abs, tag = 'smem constant byte address 0x4 - core index']
  #allocation1 [shape = 'u32[72,128]{1,0:T(1,128)}', space=vmem, size = 0x9000, scoped, tag = 'internal scratch']
  %s0 = inlined_call_operand.vmem [shape: bf16[2,256,128], index: 0, kind: input, shape index: {}]
  %s1 = inlined_call_operand.vmem [shape: f32[2,1,128], index: 1, kind: input, shape index: {}]
  %s2 = inlined_call_operand.vmem [shape: bf16[128,128], index: 2, kind: input, shape index: {}]
  %s3 = inlined_call_operand.vmem [shape: f32[1,8], index: 3, kind: input, shape index: {}]
  %s4 = inlined_call_operand.vmem [shape: f32[2,256,8], index: 4, kind: input, shape index: {}]
  %s5 = inlined_call_operand.vmem [shape: f32[2,256,8], index: 5, kind: output, shape index: {}]
  %s6 = sld [smem:[#allocation0]]
  $region53: #{effi_dws_conv_unit_forward.3} parent=0
    _
  %s8 = ssub.s32 1, %s6
  %s9 = scalar_select 0, %s8, %s6
  loop: start=0, step=1, limit=4
  $region2: #{effi_dws_conv_unit_forward.3} parent=0 // loop_pre_header
    _
  $region3: #{effi_dws_conv_unit_forward.3} parent=0 // loop_header
    %s11 = sphi 0, %s15
    %p12 = scmp.ge.s32.totalorder %s11, 4
    %s18 = sphi 0, %s30
    %s19 = sphi 0, %s26
    %s20 = sphi 0, %s18
    %s21 = sphi 0, %s19
    %s22 = sphi 0, %s20
    %s23 = sphi 0, %s21
    %s35 = sphi 0, %s37
    %s38 = sphi 0, %s35
    %s39 = sphi 0, %s38
    %s55 = sphi 0, %s39
    %s61 = sphi 0, %s63
    %s64 = sphi 0, %s61
    %s65 = sphi 0, %s64
    %s81 = sphi 0, %s65
    %s85 = sphi 0, %s85
    %s87 = sphi 0, %s85
    %s88 = sphi 0, %s87
    %s102 = sphi 0, %s88
    %s106 = sphi 0, %s106
    %s108 = sphi 0, %s106
    %s109 = sphi 0, %s108
    %s123 = sphi 0, %s109
    %s131 = sphi 0, %s133
    %s134 = sphi 0, %s131
    %s135 = sphi 0, %s134
    %s151 = sphi 0, %s135
    %s159 = sphi 0, %s161
    %s162 = sphi 0, %s159
    %s163 = sphi 0, %s162
    %s179 = sphi 0, %s163
  $region4: #{effi_dws_conv_unit_forward.3} parent=0 // loop_header_branch
    %14 = sbr.rel (%p12) target = $region8
  $region5: #{effi_dws_conv_unit_forward.3} parent=0 // loop_body
    %s16 = ssub.s32 %s11, 1
    %s17 = ssub.s32 %s11, 2
    %s24 = sadd.s32 1, %s19
    %p25 = scmp.ge.s32.totalorder %s24, 1
    %s26 = scalar_select %p25, 0, %s24
    %s27 = sadd.s32 1, %s18
    %s28 = scalar_select %p25, %s27, %s18
    %p29 = scmp.ge.s32.totalorder %s28, 2
    %s30 = scalar_select %p29, 0, %s28
    %s31 = ssub.s32 %s18, %s30
    %s32 = ssub.s32 %s19, %s26
    %s33 = sor.u32 %s31, %s32
    %p34 = scmp.eq.s32.totalorder %s33, 0
    %s36 = sadd.s32 %s35, 1
    %s37 = scalar_select %p34, %s35, %s36
    %p40 = pneg %p34
    %p41 = scmp.eq.s32.totalorder %s11, 1
    %p42 = por %p40, %p41
    %p43 = scmp.ne.s32.totalorder %s35, %s38
    %p44 = scmp.eq.s32.totalorder %s11, 0
    %p45 = por %p43, %p44
    %p46 = scmp.ne.s32.totalorder %s35, %s38
    %p47 = scmp.eq.s32.totalorder %s16, 1
    %p48 = por %p46, %p47
    %p49 = scmp.ne.s32.totalorder %s38, %s39
    %p50 = scmp.eq.s32.totalorder %s16, 0
    %p51 = por %p49, %p50
    %p52 = scmp.ne.s32.totalorder %s38, %s39
    %p53 = scmp.eq.s32.totalorder %s17, 1
    %p54 = por %p52, %p53
    %p56 = scmp.ne.s32.totalorder %s39, %s55
    %p57 = scmp.eq.s32.totalorder %s17, 0
    %p58 = por %p56, %p57
    %s59 = ssub.s32 %s18, %s30
    %p60 = scmp.eq.s32.totalorder %s59, 0
    %s62 = sadd.s32 %s61, 1
    %s63 = scalar_select %p60, %s61, %s62
    %p66 = pneg %p60
    %p67 = scmp.eq.s32.totalorder %s11, 1
    %p68 = por %p66, %p67
    %p69 = scmp.ne.s32.totalorder %s61, %s64
    %p70 = scmp.eq.s32.totalorder %s11, 0
    %p71 = por %p69, %p70
    %p72 = scmp.ne.s32.totalorder %s61, %s64
    %p73 = scmp.eq.s32.totalorder %s16, 1
    %p74 = por %p72, %p73
    %p75 = scmp.ne.s32.totalorder %s64, %s65
    %p76 = scmp.eq.s32.totalorder %s16, 0
    %p77 = por %p75, %p76
    %p78 = scmp.ne.s32.totalorder %s64, %s65
    %p79 = scmp.eq.s32.totalorder %s17, 1
    %p80 = por %p78, %p79
    %p82 = scmp.ne.s32.totalorder %s65, %s81
    %p83 = scmp.eq.s32.totalorder %s17, 0
    %p84 = por %p82, %p83
    %s86 = sadd.s32 %s85, 1
    %p89 = scmp.eq.s32.totalorder %s11, 1
    %p90 = scmp.ne.s32.totalorder %s85, %s87
    %p91 = scmp.eq.s32.totalorder %s11, 0
    %p92 = por %p90, %p91
    %p93 = scmp.ne.s32.totalorder %s85, %s87
    %p94 = scmp.eq.s32.totalorder %s16, 1
    %p95 = por %p93, %p94
    %p96 = scmp.ne.s32.totalorder %s87, %s88
    %p97 = scmp.eq.s32.totalorder %s16, 0
    %p98 = por %p96, %p97
    %p99 = scmp.ne.s32.totalorder %s87, %s88
    %p100 = scmp.eq.s32.totalorder %s17, 1
    %p101 = por %p99, %p100
    %p103 = scmp.ne.s32.totalorder %s88, %s102
    %p104 = scmp.eq.s32.totalorder %s17, 0
    %p105 = por %p103, %p104
    %s107 = sadd.s32 %s106, 1
    %p110 = scmp.eq.s32.totalorder %s11, 1
    %p111 = scmp.ne.s32.totalorder %s106, %s108
    %p112 = scmp.eq.s32.totalorder %s11, 0
    %p113 = por %p111, %p112
    %p114 = scmp.ne.s32.totalorder %s106, %s108
    %p115 = scmp.eq.s32.totalorder %s16, 1
    %p116 = por %p114, %p115
    %p117 = scmp.ne.s32.totalorder %s108, %s109
    %p118 = scmp.eq.s32.totalorder %s16, 0
    %p119 = por %p117, %p118
    %p120 = scmp.ne.s32.totalorder %s108, %s109
    %p121 = scmp.eq.s32.totalorder %s17, 1
    %p122 = por %p120, %p121
    %p124 = scmp.ne.s32.totalorder %s109, %s123
    %p125 = scmp.eq.s32.totalorder %s17, 0
    %p126 = por %p124, %p125
    %s127 = ssub.s32 %s18, %s30
    %s128 = ssub.s32 %s19, %s26
    %s129 = sor.u32 %s127, %s128
    %p130 = scmp.eq.s32.totalorder %s129, 0
    %s132 = sadd.s32 %s131, 1
    %s133 = scalar_select %p130, %s131, %s132
    %p136 = pneg %p130
    %p137 = scmp.eq.s32.totalorder %s11, 1
    %p138 = por %p136, %p137
    %p139 = scmp.ne.s32.totalorder %s131, %s134
    %p140 = scmp.eq.s32.totalorder %s11, 0
    %p141 = por %p139, %p140
    %p142 = scmp.ne.s32.totalorder %s131, %s134
    %p143 = scmp.eq.s32.totalorder %s16, 1
    %p144 = por %p142, %p143
    %p145 = scmp.ne.s32.totalorder %s134, %s135
    %p146 = scmp.eq.s32.totalorder %s16, 0
    %p147 = por %p145, %p146
    %p148 = scmp.ne.s32.totalorder %s134, %s135
    %p149 = scmp.eq.s32.totalorder %s17, 1
    %p150 = por %p148, %p149
    %p152 = scmp.ne.s32.totalorder %s135, %s151
    %p153 = scmp.eq.s32.totalorder %s17, 0
    %p154 = por %p152, %p153
    %s155 = ssub.s32 %s18, %s30
    %s156 = ssub.s32 %s19, %s26
    %s157 = sor.u32 %s155, %s156
    %p158 = scmp.eq.s32.totalorder %s157, 0
    %s160 = sadd.s32 %s159, 1
    %s161 = scalar_select %p158, %s159, %s160
    %p164 = pneg %p158
    %p165 = scmp.eq.s32.totalorder %s11, 1
    %p166 = por %p164, %p165
    %p167 = scmp.ne.s32.totalorder %s159, %s162
    %p168 = scmp.eq.s32.totalorder %s11, 0
    %p169 = por %p167, %p168
    %p170 = scmp.ne.s32.totalorder %s159, %s162
    %p171 = scmp.eq.s32.totalorder %s16, 1
    %p172 = por %p170, %p171
    %p173 = scmp.ne.s32.totalorder %s162, %s163
    %p174 = scmp.eq.s32.totalorder %s16, 0
    %p175 = por %p173, %p174
    %p176 = scmp.ne.s32.totalorder %s162, %s163
    %p177 = scmp.eq.s32.totalorder %s17, 1
    %p178 = por %p176, %p177
    %p180 = scmp.ne.s32.totalorder %s163, %s179
    %p181 = scmp.eq.s32.totalorder %s17, 0
    %p182 = por %p180, %p181
    %p183 = scmp.le.s32.totalorder 1, %s11
    %p184 = scmp.lt.s32.totalorder %s11, 3
    %p185 = pnand %p183, %p184
    %p186 = pneg %p185
    // Predicated region
    $region9: #{effi_dws_conv_unit_forward.3} parent=5 // pred_check
      _
    $region10: #{effi_dws_conv_unit_forward.3} parent=5 // pred_check_branch
      %188 = sbr.rel (%p185) target = $region12
    $region11: #{effi_dws_conv_unit_forward.3} parent=5 // pred_region
      %s189 = ssub.s32 %s11, 1
      // Predicated region
      $region13: #{effi_dws_conv_unit_forward.3} parent=11 // pred_check
        %p190 = pneg %p98
      $region14: #{effi_dws_conv_unit_forward.3} parent=11 // pred_check_branch
        %192 = sbr.rel (%p190) target = $region16
      $region15: #{effi_dws_conv_unit_forward.3} parent=11 // pred_region
        _
      $region16: #{effi_dws_conv_unit_forward.3} parent=11 // pred_fallthru
        _
      // Predicated region
      $region17: #{effi_dws_conv_unit_forward.3} parent=11 // pred_check
        %p193 = pneg %p119
      $region18: #{effi_dws_conv_unit_forward.3} parent=11 // pred_check_branch
        %195 = sbr.rel (%p193) target = $region20
      $region19: #{effi_dws_conv_unit_forward.3} parent=11 // pred_region
        _
      $region20: #{effi_dws_conv_unit_forward.3} parent=11 // pred_fallthru
        _
    $region12: #{effi_dws_conv_unit_forward.3} parent=5 // pred_fallthru
      _
    %p196 = scmp.lt.s32.totalorder %s11, 2
    // Predicated region
    $region21: #{effi_dws_conv_unit_forward.3} parent=5 // pred_check
      %p197 = pneg %p196
    $region22: #{effi_dws_conv_unit_forward.3} parent=5 // pred_check_branch
      %199 = sbr.rel (%p197) target = $region24
    $region23: #{effi_dws_conv_unit_forward.3} parent=5 // pred_region
      // Predicated region
      $region25: #{effi_dws_conv_unit_forward.3} parent=23 // pred_check
        %p200 = pneg %p45
      $region26: #{effi_dws_conv_unit_forward.3} parent=23 // pred_check_branch
        %202 = sbr.rel (%p200) target = $region28
      $region27: #{effi_dws_conv_unit_forward.3} parent=23 // pred_region
        %s203 = smul.u32 32, %s19
        %p204 = scmp.lt.s32.totalorder %s18, 1
        %s205 = scalar_select %p204, %s18, 1
        %p206 = scmp.lt.s32.totalorder %s203, 31
        %s207 = scalar_select %p206, %s203, 31
        %s208 = smul.addr %s205, 32
        %s209 = sadd.s32 %s207, %s208
        %s210 = smul.addr %s209, 4
        %s211 = scalar_lea.vmem %s0, %s210
        %s212 = smul.u32 32, %s19
      $region28: #{effi_dws_conv_unit_forward.3} parent=23 // pred_fallthru
        _
      // Predicated region
      $region29: #{effi_dws_conv_unit_forward.3} parent=23 // pred_check
        %p213 = pneg %p71
      $region30: #{effi_dws_conv_unit_forward.3} parent=23 // pred_check_branch
        %215 = sbr.rel (%p213) target = $region32
      $region31: #{effi_dws_conv_unit_forward.3} parent=23 // pred_region
        %p216 = scmp.lt.s32.totalorder %s18, 1
        %s217 = scalar_select %p216, %s18, 1
        %s218 = scalar_lea.vmem %s1, %s217
      $region32: #{effi_dws_conv_unit_forward.3} parent=23 // pred_fallthru
        _
      // Predicated region
      $region33: #{effi_dws_conv_unit_forward.3} parent=23 // pred_check
        %p219 = pneg %p141
      $region34: #{effi_dws_conv_unit_forward.3} parent=23 // pred_check_branch
        %221 = sbr.rel (%p219) target = $region36
      $region35: #{effi_dws_conv_unit_forward.3} parent=23 // pred_region
        %s222 = smul.u32 32, %s19
        %p223 = scmp.lt.s32.totalorder %s18, 1
        %s224 = scalar_select %p223, %s18, 1
        %p225 = scmp.lt.s32.totalorder %s222, 31
        %s226 = scalar_select %p225, %s222, 31
        %s227 = smul.addr %s224, 32
        %s228 = sadd.s32 %s226, %s227
        %s229 = smul.addr %s228, 8
        %s230 = scalar_lea.vmem %s4, %s229
        %s231 = smul.u32 32, %s19
      $region36: #{effi_dws_conv_unit_forward.3} parent=23 // pred_fallthru
        _
    $region24: #{effi_dws_conv_unit_forward.3} parent=5 // pred_fallthru
      _
    %p232 = scmp.le.s32.totalorder 1, %s11
    %p233 = scmp.lt.s32.totalorder %s11, 3
    %p234 = pnand %p232, %p233
    %p235 = pneg %p234
    // Predicated region
    $region37: #{effi_dws_conv_unit_forward.3} parent=5 // pred_check
      _
    $region38: #{effi_dws_conv_unit_forward.3} parent=5 // pred_check_branch
      %237 = sbr.rel (%p234) target = $region40
    $region39: #{effi_dws_conv_unit_forward.3} parent=5 // pred_region
      %s238 = ssub.s32 %s11, 1
      %s239 = smul.u32 32, %s21
      %p240 = scmp.lt.s32.totalorder %s20, 1
      %s241 = scalar_select %p240, %s20, 1
      %p242 = scmp.lt.s32.totalorder %s239, 31
      %s243 = scalar_select %p242, %s239, 31
      %s244 = smul.addr %s241, 32
      %s245 = sadd.s32 %s243, %s244
      %s246 = smul.addr %s245, 4
      %s247 = scalar_lea.vmem %s0, %s246
      %p248 = pneg %p51
      %p249 = pneg %p48
      %p250 = scmp.lt.s32.totalorder %s20, 1
      %s251 = scalar_select %p250, %s20, 1
      %s252 = scalar_lea.vmem %s1, %s251
      %p253 = pneg %p77
      %p254 = pneg %p74
      %p255 = pneg %p98
      %p256 = pneg %p95
      %p257 = pneg %p119
      %p258 = pneg %p116
      %s259 = smul.u32 32, %s21
      %p260 = scmp.lt.s32.totalorder %s20, 1
      %s261 = scalar_select %p260, %s20, 1
      %p262 = scmp.lt.s32.totalorder %s259, 31
      %s263 = scalar_select %p262, %s259, 31
      %s264 = smul.addr %s261, 32
      %s265 = sadd.s32 %s263, %s264
      %s266 = smul.addr %s265, 8
      %s267 = scalar_lea.vmem %s4, %s266
      %p268 = pneg %p147
      %p269 = pneg %p144
      %p270 = pneg %p175
      %p271 = pneg %p172
      %s272 = smul.u32 32, %s21
      %p273 = scmp.lt.s32.totalorder %s20, 1
      %s274 = scalar_select %p273, %s20, 1
      %p275 = scmp.lt.s32.totalorder %s272, 31
      %s276 = scalar_select %p275, %s272, 31
      %s277 = smul.addr %s274, 32
      %s278 = sadd.s32 %s276, %s277
      %s279 = smul.addr %s278, 8
      %s280 = scalar_lea.vmem %s5, %s279
      %s281 = smul.u32 32, %s21
      %p282 = scmp.lt.s32.totalorder %s20, 1
      %s283 = scalar_select %p282, %s20, 1
      %p284 = scmp.lt.s32.totalorder %s281, 31
      %s285 = scalar_select %p284, %s281, 31
      %s286 = smul.addr %s283, 32
      %s287 = sadd.s32 %s285, %s286
      %s288 = smul.addr %s287, 4
      %s289 = scalar_lea.vmem %s0, %s288
      %s290 = smul.u32 32, %s21
      %p291 = scmp.lt.s32.totalorder %s20, 1
      %s292 = scalar_select %p291, %s20, 1
      %s293 = scalar_lea.vmem %s1, %s292
      %s294 = smul.u32 32, %s21
      %p295 = scmp.lt.s32.totalorder %s20, 1
      %s296 = scalar_select %p295, %s20, 1
      %p297 = scmp.lt.s32.totalorder %s294, 31
      %s298 = scalar_select %p297, %s294, 31
      %s299 = smul.addr %s296, 32
      %s300 = sadd.s32 %s298, %s299
      %s301 = smul.addr %s300, 8
      %s302 = scalar_lea.vmem %s4, %s301
      %s303 = smul.u32 32, %s21
      %s304 = smul.u32 32, %s21
      %p305 = scmp.lt.s32.totalorder %s20, 1
      %s306 = scalar_select %p305, %s20, 1
      %p307 = scmp.lt.s32.totalorder %s304, 31
      %s308 = scalar_select %p307, %s304, 31
      %s309 = smul.addr %s306, 32
      %s310 = sadd.s32 %s308, %s309
      %s311 = smul.addr %s310, 8
      %s312 = scalar_lea.vmem %s5, %s311
      %s313 = smul.u32 32, %s21
      %v314 = vld [vmem:[%s289] sm:$0xf]
      %v315 = vld [vmem:[%s289 + $0x4] sm:$0xf]
      %v316 = vld [vmem:[%s289 + $0x8] sm:$0xf]
      %v317 = vld [vmem:[%s289 + $0xc] sm:$0xf]
      %v318 = vld [vmem:[%s289 + $0x10] sm:$0xf]
      %v319 = vld [vmem:[%s289 + $0x14] sm:$0xf]
      %v320 = vld [vmem:[%s289 + $0x18] sm:$0xf]
      %v321 = vld [vmem:[%s289 + $0x1c] sm:$0xf]
      %v322 = vld [vmem:[%s289 + $0x20] sm:$0xf]
      %v323 = vld [vmem:[%s289 + $0x24] sm:$0xf]
      %v324 = vld [vmem:[%s289 + $0x28] sm:$0xf]
      %v325 = vld [vmem:[%s289 + $0x2c] sm:$0xf]
      %v326 = vld [vmem:[%s289 + $0x30] sm:$0xf]
      %v327 = vld [vmem:[%s289 + $0x34] sm:$0xf]
      %v328 = vld [vmem:[%s289 + $0x38] sm:$0xf]
      %v329 = vld [vmem:[%s289 + $0x3c] sm:$0xf]
      %v330 = vld [vmem:[%s289 + $0x40] sm:$0xf]
      %v331 = vld [vmem:[%s289 + $0x44] sm:$0xf]
      %v332 = vld [vmem:[%s289 + $0x48] sm:$0xf]
      %v333 = vld [vmem:[%s289 + $0x4c] sm:$0xf]
      %v334 = vld [vmem:[%s289 + $0x50] sm:$0xf]
      %v335 = vld [vmem:[%s289 + $0x54] sm:$0xf]
      %v336 = vld [vmem:[%s289 + $0x58] sm:$0xf]
      %v337 = vld [vmem:[%s289 + $0x5c] sm:$0xf]
      %v338 = vld [vmem:[%s289 + $0x60] sm:$0xf]
      %v339 = vld [vmem:[%s289 + $0x64] sm:$0xf]
      %v340 = vld [vmem:[%s289 + $0x68] sm:$0xf]
      %v341 = vld [vmem:[%s289 + $0x6c] sm:$0xf]
      %v342 = vld [vmem:[%s289 + $0x70] sm:$0xf]
      %v343 = vld [vmem:[%s289 + $0x74] sm:$0xf]
      %v344 = vld [vmem:[%s289 + $0x78] sm:$0xf]
      %v345 = vld [vmem:[%s289 + $0x7c] sm:$0xf]
      %v346 = vunpack.c.l.bf16 %v314
      %v347 = vunpack.c.l.bf16 %v315
      %v348 = vunpack.c.l.bf16 %v316
      %v349 = vunpack.c.l.bf16 %v317
      %v350 = vunpack.c.l.bf16 %v318
      %v351 = vunpack.c.l.bf16 %v319
      %v352 = vunpack.c.l.bf16 %v320
      %v353 = vunpack.c.l.bf16 %v321
      %v354 = vunpack.c.l.bf16 %v322
      %v355 = vunpack.c.l.bf16 %v323
      %v356 = vunpack.c.l.bf16 %v324
      %v357 = vunpack.c.l.bf16 %v325
      %v358 = vunpack.c.l.bf16 %v326
      %v359 = vunpack.c.l.bf16 %v327
      %v360 = vunpack.c.l.bf16 %v328
      %v361 = vunpack.c.l.bf16 %v329
      %v362 = vunpack.c.l.bf16 %v330
      %v363 = vunpack.c.l.bf16 %v331
      %v364 = vunpack.c.l.bf16 %v332
      %v365 = vunpack.c.l.bf16 %v333
      %v366 = vunpack.c.l.bf16 %v334
      %v367 = vunpack.c.l.bf16 %v335
      %v368 = vunpack.c.l.bf16 %v336
      %v369 = vunpack.c.l.bf16 %v337
      %v370 = vunpack.c.l.bf16 %v338
      %v371 = vunpack.c.l.bf16 %v339
      %v372 = vunpack.c.l.bf16 %v340
      %v373 = vunpack.c.l.bf16 %v341
      %v374 = vunpack.c.l.bf16 %v342
      %v375 = vunpack.c.l.bf16 %v343
      %v376 = vunpack.c.l.bf16 %v344
      %v377 = vunpack.c.l.bf16 %v345
      %v378 = vld [vmem:[%s293] sm:$0x1]
      %v380 = vperm.slane %v378, 0
      %v382 = vmul.f32 %v346, %v380
      %v383 = vmul.f32 %v347, %v380
      %v384 = vmul.f32 %v348, %v380
      %v385 = vmul.f32 %v349, %v380
      %v386 = vmul.f32 %v350, %v380
      %v387 = vmul.f32 %v351, %v380
      %v388 = vmul.f32 %v352, %v380
      %v389 = vmul.f32 %v353, %v380
      %v390 = vmul.f32 %v354, %v380
      %v391 = vmul.f32 %v355, %v380
      %v392 = vmul.f32 %v356, %v380
      %v393 = vmul.f32 %v357, %v380
      %v394 = vmul.f32 %v358, %v380
      %v395 = vmul.f32 %v359, %v380
      %v396 = vmul.f32 %v360, %v380
      %v397 = vmul.f32 %v361, %v380
      %v398 = vmul.f32 %v362, %v380
      %v399 = vmul.f32 %v363, %v380
      %v400 = vmul.f32 %v364, %v380
      %v401 = vmul.f32 %v365, %v380
      %v402 = vmul.f32 %v366, %v380
      %v403 = vmul.f32 %v367, %v380
      %v404 = vmul.f32 %v368, %v380
      %v405 = vmul.f32 %v369, %v380
      %v406 = vmul.f32 %v370, %v380
      %v407 = vmul.f32 %v371, %v380
      %v408 = vmul.f32 %v372, %v380
      %v409 = vmul.f32 %v373, %v380
      %v410 = vmul.f32 %v374, %v380
      %v411 = vmul.f32 %v375, %v380
      %v412 = vmul.f32 %v376, %v380
      %v413 = vmul.f32 %v377, %v380
      %v414 = vpack.c.bf16 %v383, %v382
      %v415 = vpack.c.bf16 %v385, %v384
      %v416 = vpack.c.bf16 %v387, %v386
      %v417 = vpack.c.bf16 %v389, %v388
      %v418 = vpack.c.bf16 %v391, %v390
      %v419 = vpack.c.bf16 %v393, %v392
      %v420 = vpack.c.bf16 %v395, %v394
      %v421 = vpack.c.bf16 %v397, %v396
      %v422 = vpack.c.bf16 %v399, %v398
      %v423 = vpack.c.bf16 %v401, %v400
      %v424 = vpack.c.bf16 %v403, %v402
      %v425 = vpack.c.bf16 %v405, %v404
      %v426 = vpack.c.bf16 %v407, %v406
      %v427 = vpack.c.bf16 %v409, %v408
      %v428 = vpack.c.bf16 %v411, %v410
      %v429 = vpack.c.bf16 %v413, %v412
      %v430 = vld [vmem:[%s2] sm:$0xf]
      %v431 = vld [vmem:[%s2 + $0x4] sm:$0xf]
      %v432 = vld [vmem:[%s2 + $0x8] sm:$0xf]
      %v433 = vld [vmem:[%s2 + $0xc] sm:$0xf]
      %v434 = vld [vmem:[%s2 + $0x10] sm:$0xf]
      %v435 = vld [vmem:[%s2 + $0x14] sm:$0xf]
      %v436 = vld [vmem:[%s2 + $0x18] sm:$0xf]
      %v437 = vld [vmem:[%s2 + $0x1c] sm:$0xf]
      %v438 = vld [vmem:[%s2 + $0x20] sm:$0xf]
      %v439 = vld [vmem:[%s2 + $0x24] sm:$0xf]
      %v440 = vld [vmem:[%s2 + $0x28] sm:$0xf]
      %v441 = vld [vmem:[%s2 + $0x2c] sm:$0xf]
      %v442 = vld [vmem:[%s2 + $0x30] sm:$0xf]
      %v443 = vld [vmem:[%s2 + $0x34] sm:$0xf]
      %v444 = vld [vmem:[%s2 + $0x38] sm:$0xf]
      %v445 = vld [vmem:[%s2 + $0x3c] sm:$0xf]
      %v462 = vunpack.c.l.b16 %v430
      %v463 = vunpack.c.l.b16 %v431
      %v464 = vunpack.c.l.b16 %v432
      %v465 = vunpack.c.l.b16 %v433
      %v466 = vunpack.c.l.b16 %v434
      %v467 = vunpack.c.l.b16 %v435
      %v468 = vunpack.c.l.b16 %v436
      %v469 = vunpack.c.l.b16 %v437
      %v470 = vunpack.c.l.b16 %v438
      %v471 = vunpack.c.l.b16 %v439
      %v472 = vunpack.c.l.b16 %v440
      %v473 = vunpack.c.l.b16 %v441
      %v474 = vunpack.c.l.b16 %v442
      %v475 = vunpack.c.l.b16 %v443
      %v476 = vunpack.c.l.b16 %v444
      %v477 = vunpack.c.l.b16 %v445
      %v478 = vpack.c.b16 %v463, %v462
      %v479 = vpack.c.b16 %v465, %v464
      %v480 = vpack.c.b16 %v467, %v466
      %v481 = vpack.c.b16 %v469, %v468
      %v482 = vpack.c.b16 %v471, %v470
      %v483 = vpack.c.b16 %v473, %v472
      %v484 = vpack.c.b16 %v475, %v474
      %v485 = vpack.c.b16 %v477, %v476
      %494 = vmatpush.bf16.msra.mxu0 %v485
      %495 = vmatpush.bf16.msra.mxu0 %v484
      %496 = vmatpush.bf16.msra.mxu0 %v483
      %497 = vmatpush.bf16.msra.mxu0 %v482
      %498 = vmatpush.bf16.msra.mxu0 %v481
      %499 = vmatpush.bf16.msra.mxu0 %v480
      %500 = vmatpush.bf16.msra.mxu0 %v479
      %501 = vmatpush.bf16.msra.mxu0 %v478
      %502 = vmatmul.bf16.gmra.mxu0 %v414
      %v503 = vpop.f32.mrf.mxu0
      %v504 = vadd.f32 0.0, %v503
      %v505 = vpop.f32.mrf.mxu0
      %v506 = vadd.f32 0.0, %v505
      %507 = vmatmul.bf16.gmra.mxu0 %v415
      %v508 = vpop.f32.mrf.mxu0
      %v509 = vadd.f32 0.0, %v508
      %v510 = vpop.f32.mrf.mxu0
      %v511 = vadd.f32 0.0, %v510
      %512 = vmatmul.bf16.gmra.mxu0 %v416
      %v513 = vpop.f32.mrf.mxu0
      %v514 = vadd.f32 0.0, %v513
      %v515 = vpop.f32.mrf.mxu0
      %v516 = vadd.f32 0.0, %v515
      %517 = vmatmul.bf16.gmra.mxu0 %v417
      %v518 = vpop.f32.mrf.mxu0
      %v519 = vadd.f32 0.0, %v518
      %v520 = vpop.f32.mrf.mxu0
      %v521 = vadd.f32 0.0, %v520
      %522 = vmatmul.bf16.gmra.mxu0 %v418
      %v523 = vpop.f32.mrf.mxu0
      %v524 = vadd.f32 0.0, %v523
      %v525 = vpop.f32.mrf.mxu0
      %v526 = vadd.f32 0.0, %v525
      %527 = vmatmul.bf16.gmra.mxu0 %v419
      %v528 = vpop.f32.mrf.mxu0
      %v529 = vadd.f32 0.0, %v528
      %v530 = vpop.f32.mrf.mxu0
      %v531 = vadd.f32 0.0, %v530
      %532 = vmatmul.bf16.gmra.mxu0 %v420
      %v533 = vpop.f32.mrf.mxu0
      %v534 = vadd.f32 0.0, %v533
      %v535 = vpop.f32.mrf.mxu0
      %v536 = vadd.f32 0.0, %v535
      %537 = vmatmul.bf16.gmra.mxu0 %v421
      %v538 = vpop.f32.mrf.mxu0
      %v539 = vadd.f32 0.0, %v538
      %v540 = vpop.f32.mrf.mxu0
      %v541 = vadd.f32 0.0, %v540
      %542 = vmatmul.bf16.gmra.mxu0 %v422
      %v543 = vpop.f32.mrf.mxu0
      %v544 = vadd.f32 0.0, %v543
      %v545 = vpop.f32.mrf.mxu0
      %v546 = vadd.f32 0.0, %v545
      %547 = vmatmul.bf16.gmra.mxu0 %v423
      %v548 = vpop.f32.mrf.mxu0
      %v549 = vadd.f32 0.0, %v548
      %v550 = vpop.f32.mrf.mxu0
      %v551 = vadd.f32 0.0, %v550
      %552 = vmatmul.bf16.gmra.mxu0 %v424
      %v553 = vpop.f32.mrf.mxu0
      %v554 = vadd.f32 0.0, %v553
      %v555 = vpop.f32.mrf.mxu0
      %v556 = vadd.f32 0.0, %v555
      %557 = vmatmul.bf16.gmra.mxu0 %v425
      %v558 = vpop.f32.mrf.mxu0
      %v559 = vadd.f32 0.0, %v558
      %v560 = vpop.f32.mrf.mxu0
      %v561 = vadd.f32 0.0, %v560
      %562 = vmatmul.bf16.gmra.mxu0 %v426
      %v563 = vpop.f32.mrf.mxu0
      %v564 = vadd.f32 0.0, %v563
      %v565 = vpop.f32.mrf.mxu0
      %v566 = vadd.f32 0.0, %v565
      %567 = vmatmul.bf16.gmra.mxu0 %v427
      %v568 = vpop.f32.mrf.mxu0
      %v569 = vadd.f32 0.0, %v568
      %v570 = vpop.f32.mrf.mxu0
      %v571 = vadd.f32 0.0, %v570
      %572 = vmatmul.bf16.gmra.mxu0 %v428
      %v573 = vpop.f32.mrf.mxu0
      %v574 = vadd.f32 0.0, %v573
      %v575 = vpop.f32.mrf.mxu0
      %v576 = vadd.f32 0.0, %v575
      %577 = vmatmul.bf16.gmra.mxu0 %v429
      %v578 = vpop.f32.mrf.mxu0
      %v579 = vadd.f32 0.0, %v578
      %v580 = vpop.f32.mrf.mxu0
      %v581 = vadd.f32 0.0, %v580
      %582 = vdwg.mxu0
      %v583 = vld [vmem:[%s3] sm:$0x1]
      %v585 = vperm.slane %v583, 0
      %v587 = vadd.f32 %v504, %v585
      %v588 = vadd.f32 %v506, %v585
      %v589 = vadd.f32 %v509, %v585
      %v590 = vadd.f32 %v511, %v585
      %v591 = vadd.f32 %v514, %v585
      %v592 = vadd.f32 %v516, %v585
      %v593 = vadd.f32 %v519, %v585
      %v594 = vadd.f32 %v521, %v585
      %v595 = vadd.f32 %v524, %v585
      %v596 = vadd.f32 %v526, %v585
      %v597 = vadd.f32 %v529, %v585
      %v598 = vadd.f32 %v531, %v585
      %v599 = vadd.f32 %v534, %v585
      %v600 = vadd.f32 %v536, %v585
      %v601 = vadd.f32 %v539, %v585
      %v602 = vadd.f32 %v541, %v585
      %v603 = vadd.f32 %v544, %v585
      %v604 = vadd.f32 %v546, %v585
      %v605 = vadd.f32 %v549, %v585
      %v606 = vadd.f32 %v551, %v585
      %v607 = vadd.f32 %v554, %v585
      %v608 = vadd.f32 %v556, %v585
      %v609 = vadd.f32 %v559, %v585
      %v610 = vadd.f32 %v561, %v585
      %v611 = vadd.f32 %v564, %v585
      %v612 = vadd.f32 %v566, %v585
      %v613 = vadd.f32 %v569, %v585
      %v614 = vadd.f32 %v571, %v585
      %v615 = vadd.f32 %v574, %v585
      %v616 = vadd.f32 %v576, %v585
      %v617 = vadd.f32 %v579, %v585
      %v618 = vadd.f32 %v581, %v585
      %v619 = vld [vmem:[%s302] sm:$0xff]
      %v620 = vld [vmem:[%s302 + $0x8] sm:$0xff]
      %v621 = vld [vmem:[%s302 + $0x10] sm:$0xff]
      %v622 = vld [vmem:[%s302 + $0x18] sm:$0xff]
      %v623 = vld [vmem:[%s302 + $0x20] sm:$0xff]
      %v624 = vld [vmem:[%s302 + $0x28] sm:$0xff]
      %v625 = vld [vmem:[%s302 + $0x30] sm:$0xff]
      %v626 = vld [vmem:[%s302 + $0x38] sm:$0xff]
      %v627 = vld [vmem:[%s302 + $0x40] sm:$0xff]
      %v628 = vld [vmem:[%s302 + $0x48] sm:$0xff]
      %v629 = vld [vmem:[%s302 + $0x50] sm:$0xff]
      %v630 = vld [vmem:[%s302 + $0x58] sm:$0xff]
      %v631 = vld [vmem:[%s302 + $0x60] sm:$0xff]
      %v632 = vld [vmem:[%s302 + $0x68] sm:$0xff]
      %v633 = vld [vmem:[%s302 + $0x70] sm:$0xff]
      %v634 = vld [vmem:[%s302 + $0x78] sm:$0xff]
      %v635 = vld [vmem:[%s302 + $0x80] sm:$0xff]
      %v636 = vld [vmem:[%s302 + $0x88] sm:$0xff]
      %v637 = vld [vmem:[%s302 + $0x90] sm:$0xff]
      %v638 = vld [vmem:[%s302 + $0x98] sm:$0xff]
      %v639 = vld [vmem:[%s302 + $0xa0] sm:$0xff]
      %v640 = vld [vmem:[%s302 + $0xa8] sm:$0xff]
      %v641 = vld [vmem:[%s302 + $0xb0] sm:$0xff]
      %v642 = vld [vmem:[%s302 + $0xb8] sm:$0xff]
      %v643 = vld [vmem:[%s302 + $0xc0] sm:$0xff]
      %v644 = vld [vmem:[%s302 + $0xc8] sm:$0xff]
      %v645 = vld [vmem:[%s302 + $0xd0] sm:$0xff]
      %v646 = vld [vmem:[%s302 + $0xd8] sm:$0xff]
      %v647 = vld [vmem:[%s302 + $0xe0] sm:$0xff]
      %v648 = vld [vmem:[%s302 + $0xe8] sm:$0xff]
      %v649 = vld [vmem:[%s302 + $0xf0] sm:$0xff]
      %v650 = vld [vmem:[%s302 + $0xf8] sm:$0xff]
      %v651 = vadd.f32 %v587, %v619
      %v652 = vadd.f32 %v588, %v620
      %v653 = vadd.f32 %v589, %v621
      %v654 = vadd.f32 %v590, %v622
      %v655 = vadd.f32 %v591, %v623
      %v656 = vadd.f32 %v592, %v624
      %v657 = vadd.f32 %v593, %v625
      %v658 = vadd.f32 %v594, %v626
      %v659 = vadd.f32 %v595, %v627
      %v660 = vadd.f32 %v596, %v628
      %v661 = vadd.f32 %v597, %v629
      %v662 = vadd.f32 %v598, %v630
      %v663 = vadd.f32 %v599, %v631
      %v664 = vadd.f32 %v600, %v632
      %v665 = vadd.f32 %v601, %v633
      %v666 = vadd.f32 %v602, %v634
      %v667 = vadd.f32 %v603, %v635
      %v668 = vadd.f32 %v604, %v636
      %v669 = vadd.f32 %v605, %v637
      %v670 = vadd.f32 %v606, %v638
      %v671 = vadd.f32 %v607, %v639
      %v672 = vadd.f32 %v608, %v640
      %v673 = vadd.f32 %v609, %v641
      %v674 = vadd.f32 %v610, %v642
      %v675 = vadd.f32 %v611, %v643
      %v676 = vadd.f32 %v612, %v644
      %v677 = vadd.f32 %v613, %v645
      %v678 = vadd.f32 %v614, %v646
      %v679 = vadd.f32 %v615, %v647
      %v680 = vadd.f32 %v616, %v648
      %v681 = vadd.f32 %v617, %v649
      %v682 = vadd.f32 %v618, %v650
      %vm683 = vcmask 64512
      %684 = vst.msk [vmem:[%s312] sm:$0xff] %vm683, %v651
      %685 = vst.msk [vmem:[%s312 + $0x8] sm:$0xff] %vm683, %v652
      %686 = vst.msk [vmem:[%s312 + $0x10] sm:$0xff] %vm683, %v653
      %687 = vst.msk [vmem:[%s312 + $0x18] sm:$0xff] %vm683, %v654
      %688 = vst.msk [vmem:[%s312 + $0x20] sm:$0xff] %vm683, %v655
      %689 = vst.msk [vmem:[%s312 + $0x28] sm:$0xff] %vm683, %v656
      %690 = vst.msk [vmem:[%s312 + $0x30] sm:$0xff] %vm683, %v657
      %691 = vst.msk [vmem:[%s312 + $0x38] sm:$0xff] %vm683, %v658
      %692 = vst.msk [vmem:[%s312 + $0x40] sm:$0xff] %vm683, %v659
      %693 = vst.msk [vmem:[%s312 + $0x48] sm:$0xff] %vm683, %v660
      %694 = vst.msk [vmem:[%s312 + $0x50] sm:$0xff] %vm683, %v661
      %695 = vst.msk [vmem:[%s312 + $0x58] sm:$0xff] %vm683, %v662
      %696 = vst.msk [vmem:[%s312 + $0x60] sm:$0xff] %vm683, %v663
      %697 = vst.msk [vmem:[%s312 + $0x68] sm:$0xff] %vm683, %v664
      %698 = vst.msk [vmem:[%s312 + $0x70] sm:$0xff] %vm683, %v665
      %699 = vst.msk [vmem:[%s312 + $0x78] sm:$0xff] %vm683, %v666
      %700 = vst.msk [vmem:[%s312 + $0x80] sm:$0xff] %vm683, %v667
      %701 = vst.msk [vmem:[%s312 + $0x88] sm:$0xff] %vm683, %v668
      %702 = vst.msk [vmem:[%s312 + $0x90] sm:$0xff] %vm683, %v669
      %703 = vst.msk [vmem:[%s312 + $0x98] sm:$0xff] %vm683, %v670
      %704 = vst.msk [vmem:[%s312 + $0xa0] sm:$0xff] %vm683, %v671
      %705 = vst.msk [vmem:[%s312 + $0xa8] sm:$0xff] %vm683, %v672
      %706 = vst.msk [vmem:[%s312 + $0xb0] sm:$0xff] %vm683, %v673
      %707 = vst.msk [vmem:[%s312 + $0xb8] sm:$0xff] %vm683, %v674
      %708 = vst.msk [vmem:[%s312 + $0xc0] sm:$0xff] %vm683, %v675
      %709 = vst.msk [vmem:[%s312 + $0xc8] sm:$0xff] %vm683, %v676
      %710 = vst.msk [vmem:[%s312 + $0xd0] sm:$0xff] %vm683, %v677
      %711 = vst.msk [vmem:[%s312 + $0xd8] sm:$0xff] %vm683, %v678
      %712 = vst.msk [vmem:[%s312 + $0xe0] sm:$0xff] %vm683, %v679
      %713 = vst.msk [vmem:[%s312 + $0xe8] sm:$0xff] %vm683, %v680
      %714 = vst.msk [vmem:[%s312 + $0xf0] sm:$0xff] %vm683, %v681
      %715 = vst.msk [vmem:[%s312 + $0xf8] sm:$0xff] %vm683, %v682
      %s716 = smul.u32 32, %s21
      %p717 = scmp.lt.s32.totalorder %s20, 1
      %s718 = scalar_select %p717, %s20, 1
      %p719 = scmp.lt.s32.totalorder %s716, 31
      %s720 = scalar_select %p719, %s716, 31
      %s721 = smul.addr %s718, 32
      %s722 = sadd.s32 %s720, %s721
      %s723 = smul.addr %s722, 8
      %s724 = scalar_lea.vmem %s5, %s723
      // Predicated region
      $region41: #{effi_dws_conv_unit_forward.3} parent=39 // pred_check
        %p725 = pneg %p172
      $region42: #{effi_dws_conv_unit_forward.3} parent=39 // pred_check_branch
        %727 = sbr.rel (%p725) target = $region44
      $region43: #{effi_dws_conv_unit_forward.3} parent=39 // pred_region
        %s728 = smul.u32 32, %s21
      $region44: #{effi_dws_conv_unit_forward.3} parent=39 // pred_fallthru
        _
    $region40: #{effi_dws_conv_unit_forward.3} parent=5 // pred_fallthru
      _
    %p729 = scmp.le.s32.totalorder 2, %s11
    // Predicated region
    $region45: #{effi_dws_conv_unit_forward.3} parent=5 // pred_check
      %p730 = pneg %p729
    $region46: #{effi_dws_conv_unit_forward.3} parent=5 // pred_check_branch
      %732 = sbr.rel (%p730) target = $region48
    $region47: #{effi_dws_conv_unit_forward.3} parent=5 // pred_region
      %s733 = ssub.s32 %s11, 2
      // Predicated region
      $region49: #{effi_dws_conv_unit_forward.3} parent=47 // pred_check
        %p734 = pneg %p178
      $region50: #{effi_dws_conv_unit_forward.3} parent=47 // pred_check_branch
        %736 = sbr.rel (%p734) target = $region52
      $region51: #{effi_dws_conv_unit_forward.3} parent=47 // pred_region
        %s737 = smul.u32 32, %s23
        %p738 = scmp.lt.s32.totalorder %s22, 1
        %s739 = scalar_select %p738, %s22, 1
        %p740 = scmp.lt.s32.totalorder %s737, 31
        %s741 = scalar_select %p740, %s737, 31
        %s742 = smul.addr %s739, 32
        %s743 = sadd.s32 %s741, %s742
        %s744 = smul.addr %s743, 8
        %s745 = scalar_lea.vmem %s5, %s744
      $region52: #{effi_dws_conv_unit_forward.3} parent=47 // pred_fallthru
        _
    $region48: #{effi_dws_conv_unit_forward.3} parent=5 // pred_fallthru
      _
  $region6: #{effi_dws_conv_unit_forward.3} parent=0 // loop_footer
    %s15 = sadd.s32 1, %s11
  $region7: #{effi_dws_conv_unit_forward.3} parent=0 // loop_footer_branch
    %10 = sbr.rel target = $region3
  $region8: #{effi_dws_conv_unit_forward.3} parent=0 // loop_exit
    _

// kernel: effi_dws_conv_unit_forward.2
$region0: #{effi_dws_conv_unit_forward.2}
  #allocation0 [shape = 'u32[]', space=smem, size = 0x4, offset = 0x4, fixed_abs, tag = 'smem constant byte address 0x4 - core index']
  #allocation1 [shape = 'u32[72,128]{1,0:T(1,128)}', space=vmem, size = 0x9000, scoped, tag = 'internal scratch']
  %s0 = inlined_call_operand.vmem [shape: f32[2,18,18,8], index: 0, kind: input, shape index: {}]
  %s1 = inlined_call_operand.vmem [shape: f32[9,8], index: 1, kind: input, shape index: {}]
  %s2 = inlined_call_operand.vmem [shape: f32[1,8], index: 2, kind: input, shape index: {}]
  %s3 = inlined_call_operand.vmem [shape: f32[2,8], index: 3, kind: input, shape index: {}]
  %s4 = inlined_call_operand.vmem [shape: f32[2,1], index: 4, kind: input, shape index: {}]
  %s5 = inlined_call_operand.vmem [shape: f32[2,8], index: 5, kind: input, shape index: {}]
  %s6 = inlined_call_operand.vmem [shape: f32[1,8], index: 6, kind: input, shape index: {}]
  %s7 = inlined_call_operand.vmem [shape: bf16[2,256,128], index: 7, kind: output, shape index: {0}]
  %s8 = inlined_call_operand.vmem [shape: f32[2,1,128], index: 8, kind: output, shape index: {1}]
  %9 = xla_tuple %s7, %s8
  %s10 = sld [smem:[#allocation0]]
  $region69: #{effi_dws_conv_unit_forward.2} parent=0
    _
  %s12 = ssub.s32 1, %s10
  %s13 = scalar_select 0, %s12, %s10
  loop: start=0, step=1, limit=4
  $region2: #{effi_dws_conv_unit_forward.2} parent=0 // loop_pre_header
    _
  $region3: #{effi_dws_conv_unit_forward.2} parent=0 // loop_header
    %s15 = sphi 0, %s19
    %p16 = scmp.ge.s32.totalorder %s15, 4
    %s25 = sphi 0, %s27
    %s28 = sphi 0, %s25
    %s29 = sphi 0, %s28
    %s45 = sphi 0, %s29
    %s49 = sphi 0, %s49
    %s51 = sphi 0, %s49
    %s52 = sphi 0, %s51
    %s66 = sphi 0, %s52
    %s70 = sphi 0, %s70
    %s72 = sphi 0, %s70
    %s73 = sphi 0, %s72
    %s87 = sphi 0, %s73
    %s91 = sphi 0, %s91
    %s93 = sphi 0, %s91
    %s94 = sphi 0, %s93
    %s108 = sphi 0, %s94
    %s112 = sphi 0, %s112
    %s114 = sphi 0, %s112
    %s115 = sphi 0, %s114
    %s129 = sphi 0, %s115
    %s133 = sphi 0, %s133
    %s135 = sphi 0, %s133
    %s136 = sphi 0, %s135
    %s150 = sphi 0, %s136
    %s154 = sphi 0, %s154
    %s156 = sphi 0, %s154
    %s157 = sphi 0, %s156
    %s171 = sphi 0, %s157
    %s177 = sphi 0, %s179
    %s180 = sphi 0, %s177
    %s181 = sphi 0, %s180
    %s197 = sphi 0, %s181
    %s203 = sphi 0, %s205
    %s206 = sphi 0, %s203
    %s207 = sphi 0, %s206
    %s223 = sphi 0, %s207
  $region4: #{effi_dws_conv_unit_forward.2} parent=0 // loop_header_branch
    %18 = sbr.rel (%p16) target = $region8
  $region5: #{effi_dws_conv_unit_forward.2} parent=0 // loop_body
    %s20 = ssub.s32 %s15, 1
    %s21 = ssub.s32 %s15, 2
    %s22 = sadd.s32 %s15, 1
    %s23 = ssub.s32 %s15, %s22
    %p24 = scmp.eq.s32.totalorder %s23, 0
    %s26 = sadd.s32 %s25, 1
    %s27 = scalar_select %p24, %s25, %s26
    %p30 = pneg %p24
    %p31 = scmp.eq.s32.totalorder %s15, 1
    %p32 = por %p30, %p31
    %p33 = scmp.ne.s32.totalorder %s25, %s28
    %p34 = scmp.eq.s32.totalorder %s15, 0
    %p35 = por %p33, %p34
    %p36 = scmp.ne.s32.totalorder %s25, %s28
    %p37 = scmp.eq.s32.totalorder %s20, 1
    %p38 = por %p36, %p37
    %p39 = scmp.ne.s32.totalorder %s28, %s29
    %p40 = scmp.eq.s32.totalorder %s20, 0
    %p41 = por %p39, %p40
    %p42 = scmp.ne.s32.totalorder %s28, %s29
    %p43 = scmp.eq.s32.totalorder %s21, 1
    %p44 = por %p42, %p43
    %p46 = scmp.ne.s32.totalorder %s29, %s45
    %p47 = scmp.eq.s32.totalorder %s21, 0
    %p48 = por %p46, %p47
    %s50 = sadd.s32 %s49, 1
    %p53 = scmp.eq.s32.totalorder %s15, 1
    %p54 = scmp.ne.s32.totalorder %s49, %s51
    %p55 = scmp.eq.s32.totalorder %s15, 0
    %p56 = por %p54, %p55
    %p57 = scmp.ne.s32.totalorder %s49, %s51
    %p58 = scmp.eq.s32.totalorder %s20, 1
    %p59 = por %p57, %p58
    %p60 = scmp.ne.s32.totalorder %s51, %s52
    %p61 = scmp.eq.s32.totalorder %s20, 0
    %p62 = por %p60, %p61
    %p63 = scmp.ne.s32.totalorder %s51, %s52
    %p64 = scmp.eq.s32.totalorder %s21, 1
    %p65 = por %p63, %p64
    %p67 = scmp.ne.s32.totalorder %s52, %s66
    %p68 = scmp.eq.s32.totalorder %s21, 0
    %p69 = por %p67, %p68
    %s71 = sadd.s32 %s70, 1
    %p74 = scmp.eq.s32.totalorder %s15, 1
    %p75 = scmp.ne.s32.totalorder %s70, %s72
    %p76 = scmp.eq.s32.totalorder %s15, 0
    %p77 = por %p75, %p76
    %p78 = scmp.ne.s32.totalorder %s70, %s72
    %p79 = scmp.eq.s32.totalorder %s20, 1
    %p80 = por %p78, %p79
    %p81 = scmp.ne.s32.totalorder %s72, %s73
    %p82 = scmp.eq.s32.totalorder %s20, 0
    %p83 = por %p81, %p82
    %p84 = scmp.ne.s32.totalorder %s72, %s73
    %p85 = scmp.eq.s32.totalorder %s21, 1
    %p86 = por %p84, %p85
    %p88 = scmp.ne.s32.totalorder %s73, %s87
    %p89 = scmp.eq.s32.totalorder %s21, 0
    %p90 = por %p88, %p89
    %s92 = sadd.s32 %s91, 1
    %p95 = scmp.eq.s32.totalorder %s15, 1
    %p96 = scmp.ne.s32.totalorder %s91, %s93
    %p97 = scmp.eq.s32.totalorder %s15, 0
    %p98 = por %p96, %p97
    %p99 = scmp.ne.s32.totalorder %s91, %s93
    %p100 = scmp.eq.s32.totalorder %s20, 1
    %p101 = por %p99, %p100
    %p102 = scmp.ne.s32.totalorder %s93, %s94
    %p103 = scmp.eq.s32.totalorder %s20, 0
    %p104 = por %p102, %p103
    %p105 = scmp.ne.s32.totalorder %s93, %s94
    %p106 = scmp.eq.s32.totalorder %s21, 1
    %p107 = por %p105, %p106
    %p109 = scmp.ne.s32.totalorder %s94, %s108
    %p110 = scmp.eq.s32.totalorder %s21, 0
    %p111 = por %p109, %p110
    %s113 = sadd.s32 %s112, 1
    %p116 = scmp.eq.s32.totalorder %s15, 1
    %p117 = scmp.ne.s32.totalorder %s112, %s114
    %p118 = scmp.eq.s32.totalorder %s15, 0
    %p119 = por %p117, %p118
    %p120 = scmp.ne.s32.totalorder %s112, %s114
    %p121 = scmp.eq.s32.totalorder %s20, 1
    %p122 = por %p120, %p121
    %p123 = scmp.ne.s32.totalorder %s114, %s115
    %p124 = scmp.eq.s32.totalorder %s20, 0
    %p125 = por %p123, %p124
    %p126 = scmp.ne.s32.totalorder %s114, %s115
    %p127 = scmp.eq.s32.totalorder %s21, 1
    %p128 = por %p126, %p127
    %p130 = scmp.ne.s32.totalorder %s115, %s129
    %p131 = scmp.eq.s32.totalorder %s21, 0
    %p132 = por %p130, %p131
    %s134 = sadd.s32 %s133, 1
    %p137 = scmp.eq.s32.totalorder %s15, 1
    %p138 = scmp.ne.s32.totalorder %s133, %s135
    %p139 = scmp.eq.s32.totalorder %s15, 0
    %p140 = por %p138, %p139
    %p141 = scmp.ne.s32.totalorder %s133, %s135
    %p142 = scmp.eq.s32.totalorder %s20, 1
    %p143 = por %p141, %p142
    %p144 = scmp.ne.s32.totalorder %s135, %s136
    %p145 = scmp.eq.s32.totalorder %s20, 0
    %p146 = por %p144, %p145
    %p147 = scmp.ne.s32.totalorder %s135, %s136
    %p148 = scmp.eq.s32.totalorder %s21, 1
    %p149 = por %p147, %p148
    %p151 = scmp.ne.s32.totalorder %s136, %s150
    %p152 = scmp.eq.s32.totalorder %s21, 0
    %p153 = por %p151, %p152
    %s155 = sadd.s32 %s154, 1
    %p158 = scmp.eq.s32.totalorder %s15, 1
    %p159 = scmp.ne.s32.totalorder %s154, %s156
    %p160 = scmp.eq.s32.totalorder %s15, 0
    %p161 = por %p159, %p160
    %p162 = scmp.ne.s32.totalorder %s154, %s156
    %p163 = scmp.eq.s32.totalorder %s20, 1
    %p164 = por %p162, %p163
    %p165 = scmp.ne.s32.totalorder %s156, %s157
    %p166 = scmp.eq.s32.totalorder %s20, 0
    %p167 = por %p165, %p166
    %p168 = scmp.ne.s32.totalorder %s156, %s157
    %p169 = scmp.eq.s32.totalorder %s21, 1
    %p170 = por %p168, %p169
    %p172 = scmp.ne.s32.totalorder %s157, %s171
    %p173 = scmp.eq.s32.totalorder %s21, 0
    %p174 = por %p172, %p173
    %s175 = ssub.s32 %s15, %s22
    %p176 = scmp.eq.s32.totalorder %s175, 0
    %s178 = sadd.s32 %s177, 1
    %s179 = scalar_select %p176, %s177, %s178
    %p182 = pneg %p176
    %p183 = scmp.eq.s32.totalorder %s15, 1
    %p184 = por %p182, %p183
    %p185 = scmp.ne.s32.totalorder %s177, %s180
    %p186 = scmp.eq.s32.totalorder %s15, 0
    %p187 = por %p185, %p186
    %p188 = scmp.ne.s32.totalorder %s177, %s180
    %p189 = scmp.eq.s32.totalorder %s20, 1
    %p190 = por %p188, %p189
    %p191 = scmp.ne.s32.totalorder %s180, %s181
    %p192 = scmp.eq.s32.totalorder %s20, 0
    %p193 = por %p191, %p192
    %p194 = scmp.ne.s32.totalorder %s180, %s181
    %p195 = scmp.eq.s32.totalorder %s21, 1
    %p196 = por %p194, %p195
    %p198 = scmp.ne.s32.totalorder %s181, %s197
    %p199 = scmp.eq.s32.totalorder %s21, 0
    %p200 = por %p198, %p199
    %s201 = ssub.s32 %s15, %s22
    %p202 = scmp.eq.s32.totalorder %s201, 0
    %s204 = sadd.s32 %s203, 1
    %s205 = scalar_select %p202, %s203, %s204
    %p208 = pneg %p202
    %p209 = scmp.eq.s32.totalorder %s15, 1
    %p210 = por %p208, %p209
    %p211 = scmp.ne.s32.totalorder %s203, %s206
    %p212 = scmp.eq.s32.totalorder %s15, 0
    %p213 = por %p211, %p212
    %p214 = scmp.ne.s32.totalorder %s203, %s206
    %p215 = scmp.eq.s32.totalorder %s20, 1
    %p216 = por %p214, %p215
    %p217 = scmp.ne.s32.totalorder %s206, %s207
    %p218 = scmp.eq.s32.totalorder %s20, 0
    %p219 = por %p217, %p218
    %p220 = scmp.ne.s32.totalorder %s206, %s207
    %p221 = scmp.eq.s32.totalorder %s21, 1
    %p222 = por %p220, %p221
    %p224 = scmp.ne.s32.totalorder %s207, %s223
    %p225 = scmp.eq.s32.totalorder %s21, 0
    %p226 = por %p224, %p225
    %p227 = scmp.le.s32.totalorder 1, %s15
    %p228 = scmp.lt.s32.totalorder %s15, 3
    %p229 = pnand %p227, %p228
    %p230 = pneg %p229
    // Predicated region
    $region9: #{effi_dws_conv_unit_forward.2} parent=5 // pred_check
      _
    $region10: #{effi_dws_conv_unit_forward.2} parent=5 // pred_check_branch
      %232 = sbr.rel (%p229) target = $region12
    $region11: #{effi_dws_conv_unit_forward.2} parent=5 // pred_region
      %s233 = ssub.s32 %s15, 1
      // Predicated region
      $region13: #{effi_dws_conv_unit_forward.2} parent=11 // pred_check
        %p234 = pneg %p62
      $region14: #{effi_dws_conv_unit_forward.2} parent=11 // pred_check_branch
        %236 = sbr.rel (%p234) target = $region16
      $region15: #{effi_dws_conv_unit_forward.2} parent=11 // pred_region
        _
      $region16: #{effi_dws_conv_unit_forward.2} parent=11 // pred_fallthru
        _
      // Predicated region
      $region17: #{effi_dws_conv_unit_forward.2} parent=11 // pred_check
        %p237 = pneg %p83
      $region18: #{effi_dws_conv_unit_forward.2} parent=11 // pred_check_branch
        %239 = sbr.rel (%p237) target = $region20
      $region19: #{effi_dws_conv_unit_forward.2} parent=11 // pred_region
        _
      $region20: #{effi_dws_conv_unit_forward.2} parent=11 // pred_fallthru
        _
      // Predicated region
      $region21: #{effi_dws_conv_unit_forward.2} parent=11 // pred_check
        %p240 = pneg %p104
      $region22: #{effi_dws_conv_unit_forward.2} parent=11 // pred_check_branch
        %242 = sbr.rel (%p240) target = $region24
      $region23: #{effi_dws_conv_unit_forward.2} parent=11 // pred_region
        _
      $region24: #{effi_dws_conv_unit_forward.2} parent=11 // pred_fallthru
        _
      // Predicated region
      $region25: #{effi_dws_conv_unit_forward.2} parent=11 // pred_check
        %p243 = pneg %p125
      $region26: #{effi_dws_conv_unit_forward.2} parent=11 // pred_check_branch
        %245 = sbr.rel (%p243) target = $region28
      $region27: #{effi_dws_conv_unit_forward.2} parent=11 // pred_region
        _
      $region28: #{effi_dws_conv_unit_forward.2} parent=11 // pred_fallthru
        _
      // Predicated region
      $region29: #{effi_dws_conv_unit_forward.2} parent=11 // pred_check
        %p246 = pneg %p146
      $region30: #{effi_dws_conv_unit_forward.2} parent=11 // pred_check_branch
        %248 = sbr.rel (%p246) target = $region32
      $region31: #{effi_dws_conv_unit_forward.2} parent=11 // pred_region
        _
      $region32: #{effi_dws_conv_unit_forward.2} parent=11 // pred_fallthru
        _
      // Predicated region
      $region33: #{effi_dws_conv_unit_forward.2} parent=11 // pred_check
        %p249 = pneg %p167
      $region34: #{effi_dws_conv_unit_forward.2} parent=11 // pred_check_branch
        %251 = sbr.rel (%p249) target = $region36
      $region35: #{effi_dws_conv_unit_forward.2} parent=11 // pred_region
        _
      $region36: #{effi_dws_conv_unit_forward.2} parent=11 // pred_fallthru
        _
    $region12: #{effi_dws_conv_unit_forward.2} parent=5 // pred_fallthru
      _
    %p252 = scmp.lt.s32.totalorder %s15, 2
    // Predicated region
    $region37: #{effi_dws_conv_unit_forward.2} parent=5 // pred_check
      %p253 = pneg %p252
    $region38: #{effi_dws_conv_unit_forward.2} parent=5 // pred_check_branch
      %255 = sbr.rel (%p253) target = $region40
    $region39: #{effi_dws_conv_unit_forward.2} parent=5 // pred_region
      // Predicated region
      $region41: #{effi_dws_conv_unit_forward.2} parent=39 // pred_check
        %p256 = pneg %p35
      $region42: #{effi_dws_conv_unit_forward.2} parent=39 // pred_check_branch
        %258 = sbr.rel (%p256) target = $region44
      $region43: #{effi_dws_conv_unit_forward.2} parent=39 // pred_region
        %p259 = scmp.lt.s32.totalorder %s15, 1
        %s260 = scalar_select %p259, %s15, 1
        %s261 = smul.addr %s260, 54
        %s262 = smul.addr %s261, 8
        %s263 = scalar_lea.vmem %s0, %s262
      $region44: #{effi_dws_conv_unit_forward.2} parent=39 // pred_fallthru
        _
    $region40: #{effi_dws_conv_unit_forward.2} parent=5 // pred_fallthru
      _
    %p264 = scmp.le.s32.totalorder 1, %s15
    %p265 = scmp.lt.s32.totalorder %s15, 3
    %p266 = pnand %p264, %p265
    %p267 = pneg %p266
    // Predicated region
    $region45: #{effi_dws_conv_unit_forward.2} parent=5 // pred_check
      _
    $region46: #{effi_dws_conv_unit_forward.2} parent=5 // pred_check_branch
      %269 = sbr.rel (%p266) target = $region48
    $region47: #{effi_dws_conv_unit_forward.2} parent=5 // pred_region
      %s270 = ssub.s32 %s15, 1
      %p271 = scmp.lt.s32.totalorder %s20, 1
      %s272 = scalar_select %p271, %s20, 1
      %s273 = smul.addr %s272, 54
      %s274 = smul.addr %s273, 8
      %s275 = scalar_lea.vmem %s0, %s274
      %p276 = pneg %p41
      %p277 = pneg %p38
      %p278 = pneg %p62
      %p279 = pneg %p59
      %p280 = pneg %p83
      %p281 = pneg %p80
      %p282 = pneg %p104
      %p283 = pneg %p101
      %p284 = pneg %p125
      %p285 = pneg %p122
      %p286 = pneg %p146
      %p287 = pneg %p143
      %p288 = pneg %p167
      %p289 = pneg %p164
      %p290 = pneg %p193
      %p291 = pneg %p190
      %p292 = scmp.lt.s32.totalorder %s20, 1
      %s293 = scalar_select %p292, %s20, 1
      %s294 = smul.addr %s293, 32
      %s295 = smul.addr %s294, 4
      %s296 = scalar_lea.vmem %s7, %s295
      %p297 = pneg %p219
      %p298 = pneg %p216
      %p299 = scmp.lt.s32.totalorder %s20, 1
      %s300 = scalar_select %p299, %s20, 1
      %s301 = scalar_lea.vmem %s8, %s300
      %p302 = scmp.lt.s32.totalorder %s20, 1
      %s303 = scalar_select %p302, %s20, 1
      %s304 = smul.addr %s303, 54
      %s305 = smul.addr %s304, 8
      %s306 = scalar_lea.vmem %s0, %s305
      %p307 = scmp.lt.s32.totalorder %s20, 1
      %s308 = scalar_select %p307, %s20, 1
      %s309 = smul.addr %s308, 32
      %s310 = smul.addr %s309, 4
      %s311 = scalar_lea.vmem %s7, %s310
      %p312 = scmp.lt.s32.totalorder %s20, 1
      %s313 = scalar_select %p312, %s20, 1
      %s314 = scalar_lea.vmem %s8, %s313
      %v316 = vld [vmem:[%s306] sm:$0xff]
      %v317 = vld [vmem:[%s306 + $0x8] sm:$0xff]
      %v318 = vld [vmem:[%s306 + $0x18] sm:$0xff]
      %v319 = vld [vmem:[%s306 + $0x20] sm:$0xff]
      %v320 = vld [vmem:[%s306 + $0x30] sm:$0xff]
      %v321 = vld [vmem:[%s306 + $0x38] sm:$0xff]
      %v322 = vld [vmem:[%s306 + $0x48] sm:$0xff]
      %v323 = vld [vmem:[%s306 + $0x50] sm:$0xff]
      %v324 = vld [vmem:[%s306 + $0x60] sm:$0xff]
      %v325 = vld [vmem:[%s306 + $0x68] sm:$0xff]
      %v326 = vld [vmem:[%s306 + $0x78] sm:$0xff]
      %v327 = vld [vmem:[%s306 + $0x80] sm:$0xff]
      %v328 = vld [vmem:[%s306 + $0x90] sm:$0xff]
      %v329 = vld [vmem:[%s306 + $0x98] sm:$0xff]
      %v330 = vld [vmem:[%s306 + $0xa8] sm:$0xff]
      %v331 = vld [vmem:[%s306 + $0xb0] sm:$0xff]
      %v332 = vld [vmem:[%s306 + $0xc0] sm:$0xff]
      %v333 = vld [vmem:[%s306 + $0xc8] sm:$0xff]
      %v334 = vld [vmem:[%s306 + $0xd8] sm:$0xff]
      %v335 = vld [vmem:[%s306 + $0xe0] sm:$0xff]
      %v336 = vld [vmem:[%s306 + $0xf0] sm:$0xff]
      %v337 = vld [vmem:[%s306 + $0xf8] sm:$0xff]
      %v338 = vld [vmem:[%s306 + $0x108] sm:$0xff]
      %v339 = vld [vmem:[%s306 + $0x110] sm:$0xff]
      %v340 = vld [vmem:[%s306 + $0x120] sm:$0xff]
      %v341 = vld [vmem:[%s306 + $0x128] sm:$0xff]
      %v342 = vld [vmem:[%s306 + $0x138] sm:$0xff]
      %v343 = vld [vmem:[%s306 + $0x140] sm:$0xff]
      %v344 = vld [vmem:[%s306 + $0x150] sm:$0xff]
      %v345 = vld [vmem:[%s306 + $0x158] sm:$0xff]
      %v346 = vld [vmem:[%s306 + $0x168] sm:$0xff]
      %v347 = vld [vmem:[%s306 + $0x170] sm:$0xff]
      %v348 = vld [vmem:[%s1] sm:$0x1]
      %v349 = vperm.slane %v348, 0
      %v350 = vmul.f32 %v316, %v349
      %v351 = vmul.f32 %v317, %v349
      %v352 = vmul.f32 %v318, %v349
      %v353 = vmul.f32 %v319, %v349
      %v354 = vmul.f32 %v320, %v349
      %v355 = vmul.f32 %v321, %v349
      %v356 = vmul.f32 %v322, %v349
      %v357 = vmul.f32 %v323, %v349
      %v358 = vmul.f32 %v324, %v349
      %v359 = vmul.f32 %v325, %v349
      %v360 = vmul.f32 %v326, %v349
      %v361 = vmul.f32 %v327, %v349
      %v362 = vmul.f32 %v328, %v349
      %v363 = vmul.f32 %v329, %v349
      %v364 = vmul.f32 %v330, %v349
      %v365 = vmul.f32 %v331, %v349
      %v366 = vmul.f32 %v332, %v349
      %v367 = vmul.f32 %v333, %v349
      %v368 = vmul.f32 %v334, %v349
      %v369 = vmul.f32 %v335, %v349
      %v370 = vmul.f32 %v336, %v349
      %v371 = vmul.f32 %v337, %v349
      %v372 = vmul.f32 %v338, %v349
      %v373 = vmul.f32 %v339, %v349
      %v374 = vmul.f32 %v340, %v349
      %v375 = vmul.f32 %v341, %v349
      %v376 = vmul.f32 %v342, %v349
      %v377 = vmul.f32 %v343, %v349
      %v378 = vmul.f32 %v344, %v349
      %v379 = vmul.f32 %v345, %v349
      %v380 = vmul.f32 %v346, %v349
      %v381 = vmul.f32 %v347, %v349
      %v382 = vadd.f32 %v350, 0.0
      %v383 = vadd.f32 %v351, 0.0
      %v384 = vadd.f32 %v352, 0.0
      %v385 = vadd.f32 %v353, 0.0
      %v386 = vadd.f32 %v354, 0.0
      %v387 = vadd.f32 %v355, 0.0
      %v388 = vadd.f32 %v356, 0.0
      %v389 = vadd.f32 %v357, 0.0
      %v390 = vadd.f32 %v358, 0.0
      %v391 = vadd.f32 %v359, 0.0
      %v392 = vadd.f32 %v360, 0.0
      %v393 = vadd.f32 %v361, 0.0
      %v394 = vadd.f32 %v362, 0.0
      %v395 = vadd.f32 %v363, 0.0
      %v396 = vadd.f32 %v364, 0.0
      %v397 = vadd.f32 %v365, 0.0
      %v398 = vadd.f32 %v366, 0.0
      %v399 = vadd.f32 %v367, 0.0
      %v400 = vadd.f32 %v368, 0.0
      %v401 = vadd.f32 %v369, 0.0
      %v402 = vadd.f32 %v370, 0.0
      %v403 = vadd.f32 %v371, 0.0
      %v404 = vadd.f32 %v372, 0.0
      %v405 = vadd.f32 %v373, 0.0
      %v406 = vadd.f32 %v374, 0.0
      %v407 = vadd.f32 %v375, 0.0
      %v408 = vadd.f32 %v376, 0.0
      %v409 = vadd.f32 %v377, 0.0
      %v410 = vadd.f32 %v378, 0.0
      %v411 = vadd.f32 %v379, 0.0
      %v412 = vadd.f32 %v380, 0.0
      %v413 = vadd.f32 %v381, 0.0
      %v414 = vld [vmem:[%s306 + $0x1] sm:$0xff]
      %v415 = vld [vmem:[%s306 + $0x9] sm:$0xff]
      %v416 = vld [vmem:[%s306 + $0x19] sm:$0xff]
      %v417 = vld [vmem:[%s306 + $0x21] sm:$0xff]
      %v418 = vld [vmem:[%s306 + $0x31] sm:$0xff]
      %v419 = vld [vmem:[%s306 + $0x39] sm:$0xff]
      %v420 = vld [vmem:[%s306 + $0x49] sm:$0xff]
      %v421 = vld [vmem:[%s306 + $0x51] sm:$0xff]
      %v422 = vld [vmem:[%s306 + $0x61] sm:$0xff]
      %v423 = vld [vmem:[%s306 + $0x69] sm:$0xff]
      %v424 = vld [vmem:[%s306 + $0x79] sm:$0xff]
      %v425 = vld [vmem:[%s306 + $0x81] sm:$0xff]
      %v426 = vld [vmem:[%s306 + $0x91] sm:$0xff]
      %v427 = vld [vmem:[%s306 + $0x99] sm:$0xff]
      %v428 = vld [vmem:[%s306 + $0xa9] sm:$0xff]
      %v429 = vld [vmem:[%s306 + $0xb1] sm:$0xff]
      %v430 = vld [vmem:[%s306 + $0xc1] sm:$0xff]
      %v431 = vld [vmem:[%s306 + $0xc9] sm:$0xff]
      %v432 = vld [vmem:[%s306 + $0xd9] sm:$0xff]
      %v433 = vld [vmem:[%s306 + $0xe1] sm:$0xff]
      %v434 = vld [vmem:[%s306 + $0xf1] sm:$0xff]
      %v435 = vld [vmem:[%s306 + $0xf9] sm:$0xff]
      %v436 = vld [vmem:[%s306 + $0x109] sm:$0xff]
      %v437 = vld [vmem:[%s306 + $0x111] sm:$0xff]
      %v438 = vld [vmem:[%s306 + $0x121] sm:$0xff]
      %v439 = vld [vmem:[%s306 + $0x129] sm:$0xff]
      %v440 = vld [vmem:[%s306 + $0x139] sm:$0xff]
      %v441 = vld [vmem:[%s306 + $0x141] sm:$0xff]
      %v442 = vld [vmem:[%s306 + $0x151] sm:$0xff]
      %v443 = vld [vmem:[%s306 + $0x159] sm:$0xff]
      %v444 = vld [vmem:[%s306 + $0x169] sm:$0xff]
      %v445 = vld [vmem:[%s306 + $0x171] sm:$0xff]
      %v446 = vld [vmem:[%s1 + $0x1] sm:$0x1]
      %v447 = vperm.slane %v446, 0
      %v448 = vmul.f32 %v414, %v447
      %v449 = vmul.f32 %v415, %v447
      %v450 = vmul.f32 %v416, %v447
      %v451 = vmul.f32 %v417, %v447
      %v452 = vmul.f32 %v418, %v447
      %v453 = vmul.f32 %v419, %v447
      %v454 = vmul.f32 %v420, %v447
      %v455 = vmul.f32 %v421, %v447
      %v456 = vmul.f32 %v422, %v447
      %v457 = vmul.f32 %v423, %v447
      %v458 = vmul.f32 %v424, %v447
      %v459 = vmul.f32 %v425, %v447
      %v460 = vmul.f32 %v426, %v447
      %v461 = vmul.f32 %v427, %v447
      %v462 = vmul.f32 %v428, %v447
      %v463 = vmul.f32 %v429, %v447
      %v464 = vmul.f32 %v430, %v447
      %v465 = vmul.f32 %v431, %v447
      %v466 = vmul.f32 %v432, %v447
      %v467 = vmul.f32 %v433, %v447
      %v468 = vmul.f32 %v434, %v447
      %v469 = vmul.f32 %v435, %v447
      %v470 = vmul.f32 %v436, %v447
      %v471 = vmul.f32 %v437, %v447
      %v472 = vmul.f32 %v438, %v447
      %v473 = vmul.f32 %v439, %v447
      %v474 = vmul.f32 %v440, %v447
      %v475 = vmul.f32 %v441, %v447
      %v476 = vmul.f32 %v442, %v447
      %v477 = vmul.f32 %v443, %v447
      %v478 = vmul.f32 %v444, %v447
      %v479 = vmul.f32 %v445, %v447
      %v480 = vadd.f32 %v382, %v448
      %v481 = vadd.f32 %v383, %v449
      %v482 = vadd.f32 %v384, %v450
      %v483 = vadd.f32 %v385, %v451
      %v484 = vadd.f32 %v386, %v452
      %v485 = vadd.f32 %v387, %v453
      %v486 = vadd.f32 %v388, %v454
      %v487 = vadd.f32 %v389, %v455
      %v488 = vadd.f32 %v390, %v456
      %v489 = vadd.f32 %v391, %v457
      %v490 = vadd.f32 %v392, %v458
      %v491 = vadd.f32 %v393, %v459
      %v492 = vadd.f32 %v394, %v460
      %v493 = vadd.f32 %v395, %v461
      %v494 = vadd.f32 %v396, %v462
      %v495 = vadd.f32 %v397, %v463
      %v496 = vadd.f32 %v398, %v464
      %v497 = vadd.f32 %v399, %v465
      %v498 = vadd.f32 %v400, %v466
      %v499 = vadd.f32 %v401, %v467
      %v500 = vadd.f32 %v402, %v468
      %v501 = vadd.f32 %v403, %v469
      %v502 = vadd.f32 %v404, %v470
      %v503 = vadd.f32 %v405, %v471
      %v504 = vadd.f32 %v406, %v472
      %v505 = vadd.f32 %v407, %v473
      %v506 = vadd.f32 %v408, %v474
      %v507 = vadd.f32 %v409, %v475
      %v508 = vadd.f32 %v410, %v476
      %v509 = vadd.f32 %v411, %v477
      %v510 = vadd.f32 %v412, %v478
      %v511 = vadd.f32 %v413, %v479
      %v512 = vld [vmem:[%s306 + $0x2] sm:$0xff]
      %v513 = vld [vmem:[%s306 + $0xa] sm:$0xff]
      %v514 = vld [vmem:[%s306 + $0x1a] sm:$0xff]
      %v515 = vld [vmem:[%s306 + $0x22] sm:$0xff]
      %v516 = vld [vmem:[%s306 + $0x32] sm:$0xff]
      %v517 = vld [vmem:[%s306 + $0x3a] sm:$0xff]
      %v518 = vld [vmem:[%s306 + $0x4a] sm:$0xff]
      %v519 = vld [vmem:[%s306 + $0x52] sm:$0xff]
      %v520 = vld [vmem:[%s306 + $0x62] sm:$0xff]
      %v521 = vld [vmem:[%s306 + $0x6a] sm:$0xff]
      %v522 = vld [vmem:[%s306 + $0x7a] sm:$0xff]
      %v523 = vld [vmem:[%s306 + $0x82] sm:$0xff]
      %v524 = vld [vmem:[%s306 + $0x92] sm:$0xff]
      %v525 = vld [vmem:[%s306 + $0x9a] sm:$0xff]
      %v526 = vld [vmem:[%s306 + $0xaa] sm:$0xff]
      %v527 = vld [vmem:[%s306 + $0xb2] sm:$0xff]
      %v528 = vld [vmem:[%s306 + $0xc2] sm:$0xff]
      %v529 = vld [vmem:[%s306 + $0xca] sm:$0xff]
      %v530 = vld [vmem:[%s306 + $0xda] sm:$0xff]
      %v531 = vld [vmem:[%s306 + $0xe2] sm:$0xff]
      %v532 = vld [vmem:[%s306 + $0xf2] sm:$0xff]
      %v533 = vld [vmem:[%s306 + $0xfa] sm:$0xff]
      %v534 = vld [vmem:[%s306 + $0x10a] sm:$0xff]
      %v535 = vld [vmem:[%s306 + $0x112] sm:$0xff]
      %v536 = vld [vmem:[%s306 + $0x122] sm:$0xff]
      %v537 = vld [vmem:[%s306 + $0x12a] sm:$0xff]
      %v538 = vld [vmem:[%s306 + $0x13a] sm:$0xff]
      %v539 = vld [vmem:[%s306 + $0x142] sm:$0xff]
      %v540 = vld [vmem:[%s306 + $0x152] sm:$0xff]
      %v541 = vld [vmem:[%s306 + $0x15a] sm:$0xff]
      %v542 = vld [vmem:[%s306 + $0x16a] sm:$0xff]
      %v543 = vld [vmem:[%s306 + $0x172] sm:$0xff]
      %v544 = vld [vmem:[%s1 + $0x2] sm:$0x1]
      %v545 = vperm.slane %v544, 0
      %v546 = vmul.f32 %v512, %v545
      %v547 = vmul.f32 %v513, %v545
      %v548 = vmul.f32 %v514, %v545
      %v549 = vmul.f32 %v515, %v545
      %v550 = vmul.f32 %v516, %v545
      %v551 = vmul.f32 %v517, %v545
      %v552 = vmul.f32 %v518, %v545
      %v553 = vmul.f32 %v519, %v545
      %v554 = vmul.f32 %v520, %v545
      %v555 = vmul.f32 %v521, %v545
      %v556 = vmul.f32 %v522, %v545
      %v557 = vmul.f32 %v523, %v545
      %v558 = vmul.f32 %v524, %v545
      %v559 = vmul.f32 %v525, %v545
      %v560 = vmul.f32 %v526, %v545
      %v561 = vmul.f32 %v527, %v545
      %v562 = vmul.f32 %v528, %v545
      %v563 = vmul.f32 %v529, %v545
      %v564 = vmul.f32 %v530, %v545
      %v565 = vmul.f32 %v531, %v545
      %v566 = vmul.f32 %v532, %v545
      %v567 = vmul.f32 %v533, %v545
      %v568 = vmul.f32 %v534, %v545
      %v569 = vmul.f32 %v535, %v545
      %v570 = vmul.f32 %v536, %v545
      %v571 = vmul.f32 %v537, %v545
      %v572 = vmul.f32 %v538, %v545
      %v573 = vmul.f32 %v539, %v545
      %v574 = vmul.f32 %v540, %v545
      %v575 = vmul.f32 %v541, %v545
      %v576 = vmul.f32 %v542, %v545
      %v577 = vmul.f32 %v543, %v545
      %v578 = vadd.f32 %v480, %v546
      %v579 = vadd.f32 %v481, %v547
      %v580 = vadd.f32 %v482, %v548
      %v581 = vadd.f32 %v483, %v549
      %v582 = vadd.f32 %v484, %v550
      %v583 = vadd.f32 %v485, %v551
      %v584 = vadd.f32 %v486, %v552
      %v585 = vadd.f32 %v487, %v553
      %v586 = vadd.f32 %v488, %v554
      %v587 = vadd.f32 %v489, %v555
      %v588 = vadd.f32 %v490, %v556
      %v589 = vadd.f32 %v491, %v557
      %v590 = vadd.f32 %v492, %v558
      %v591 = vadd.f32 %v493, %v559
      %v592 = vadd.f32 %v494, %v560
      %v593 = vadd.f32 %v495, %v561
      %v594 = vadd.f32 %v496, %v562
      %v595 = vadd.f32 %v497, %v563
      %v596 = vadd.f32 %v498, %v564
      %v597 = vadd.f32 %v499, %v565
      %v598 = vadd.f32 %v500, %v566
      %v599 = vadd.f32 %v501, %v567
      %v600 = vadd.f32 %v502, %v568
      %v601 = vadd.f32 %v503, %v569
      %v602 = vadd.f32 %v504, %v570
      %v603 = vadd.f32 %v505, %v571
      %v604 = vadd.f32 %v506, %v572
      %v605 = vadd.f32 %v507, %v573
      %v606 = vadd.f32 %v508, %v574
      %v607 = vadd.f32 %v509, %v575
      %v608 = vadd.f32 %v510, %v576
      %v609 = vadd.f32 %v511, %v577
      %s610 = scalar_lea.vmem %s306, 24
      %v611 = vld [vmem:[%s610] sm:$0xff]
      %v612 = vld [vmem:[%s610 + $0x8] sm:$0xff]
      %v613 = vld [vmem:[%s610 + $0x18] sm:$0xff]
      %v614 = vld [vmem:[%s610 + $0x20] sm:$0xff]
      %v615 = vld [vmem:[%s610 + $0x30] sm:$0xff]
      %v616 = vld [vmem:[%s610 + $0x38] sm:$0xff]
      %v617 = vld [vmem:[%s610 + $0x48] sm:$0xff]
      %v618 = vld [vmem:[%s610 + $0x50] sm:$0xff]
      %v619 = vld [vmem:[%s610 + $0x60] sm:$0xff]
      %v620 = vld [vmem:[%s610 + $0x68] sm:$0xff]
      %v621 = vld [vmem:[%s610 + $0x78] sm:$0xff]
      %v622 = vld [vmem:[%s610 + $0x80] sm:$0xff]
      %v623 = vld [vmem:[%s610 + $0x90] sm:$0xff]
      %v624 = vld [vmem:[%s610 + $0x98] sm:$0xff]
      %v625 = vld [vmem:[%s610 + $0xa8] sm:$0xff]
      %v626 = vld [vmem:[%s610 + $0xb0] sm:$0xff]
      %v627 = vld [vmem:[%s610 + $0xc0] sm:$0xff]
      %v628 = vld [vmem:[%s610 + $0xc8] sm:$0xff]
      %v629 = vld [vmem:[%s610 + $0xd8] sm:$0xff]
      %v630 = vld [vmem:[%s610 + $0xe0] sm:$0xff]
      %v631 = vld [vmem:[%s610 + $0xf0] sm:$0xff]
      %v632 = vld [vmem:[%s610 + $0xf8] sm:$0xff]
      %v633 = vld [vmem:[%s610 + $0x108] sm:$0xff]
      %v634 = vld [vmem:[%s610 + $0x110] sm:$0xff]
      %v635 = vld [vmem:[%s610 + $0x120] sm:$0xff]
      %v636 = vld [vmem:[%s610 + $0x128] sm:$0xff]
      %v637 = vld [vmem:[%s610 + $0x138] sm:$0xff]
      %v638 = vld [vmem:[%s610 + $0x140] sm:$0xff]
      %v639 = vld [vmem:[%s610 + $0x150] sm:$0xff]
      %v640 = vld [vmem:[%s610 + $0x158] sm:$0xff]
      %v641 = vld [vmem:[%s610 + $0x168] sm:$0xff]
      %v642 = vld [vmem:[%s610 + $0x170] sm:$0xff]
      %v643 = vld [vmem:[%s1 + $0x3] sm:$0x1]
      %v644 = vperm.slane %v643, 0
      %v645 = vmul.f32 %v611, %v644
      %v646 = vmul.f32 %v612, %v644
      %v647 = vmul.f32 %v613, %v644
      %v648 = vmul.f32 %v614, %v644
      %v649 = vmul.f32 %v615, %v644
      %v650 = vmul.f32 %v616, %v644
      %v651 = vmul.f32 %v617, %v644
      %v652 = vmul.f32 %v618, %v644
      %v653 = vmul.f32 %v619, %v644
      %v654 = vmul.f32 %v620, %v644
      %v655 = vmul.f32 %v621, %v644
      %v656 = vmul.f32 %v622, %v644
      %v657 = vmul.f32 %v623, %v644
      %v658 = vmul.f32 %v624, %v644
      %v659 = vmul.f32 %v625, %v644
      %v660 = vmul.f32 %v626, %v644
      %v661 = vmul.f32 %v627, %v644
      %v662 = vmul.f32 %v628, %v644
      %v663 = vmul.f32 %v629, %v644
      %v664 = vmul.f32 %v630, %v644
      %v665 = vmul.f32 %v631, %v644
      %v666 = vmul.f32 %v632, %v644
      %v667 = vmul.f32 %v633, %v644
      %v668 = vmul.f32 %v634, %v644
      %v669 = vmul.f32 %v635, %v644
      %v670 = vmul.f32 %v636, %v644
      %v671 = vmul.f32 %v637, %v644
      %v672 = vmul.f32 %v638, %v644
      %v673 = vmul.f32 %v639, %v644
      %v674 = vmul.f32 %v640, %v644
      %v675 = vmul.f32 %v641, %v644
      %v676 = vmul.f32 %v642, %v644
      %v677 = vadd.f32 %v578, %v645
      %v678 = vadd.f32 %v579, %v646
      %v679 = vadd.f32 %v580, %v647
      %v680 = vadd.f32 %v581, %v648
      %v681 = vadd.f32 %v582, %v649
      %v682 = vadd.f32 %v583, %v650
      %v683 = vadd.f32 %v584, %v651
      %v684 = vadd.f32 %v585, %v652
      %v685 = vadd.f32 %v586, %v653
      %v686 = vadd.f32 %v587, %v654
      %v687 = vadd.f32 %v588, %v655
      %v688 = vadd.f32 %v589, %v656
      %v689 = vadd.f32 %v590, %v657
      %v690 = vadd.f32 %v591, %v658
      %v691 = vadd.f32 %v592, %v659
      %v692 = vadd.f32 %v593, %v660
      %v693 = vadd.f32 %v594, %v661
      %v694 = vadd.f32 %v595, %v662
      %v695 = vadd.f32 %v596, %v663
      %v696 = vadd.f32 %v597, %v664
      %v697 = vadd.f32 %v598, %v665
      %v698 = vadd.f32 %v599, %v666
      %v699 = vadd.f32 %v600, %v667
      %v700 = vadd.f32 %v601, %v668
      %v701 = vadd.f32 %v602, %v669
      %v702 = vadd.f32 %v603, %v670
      %v703 = vadd.f32 %v604, %v671
      %v704 = vadd.f32 %v605, %v672
      %v705 = vadd.f32 %v606, %v673
      %v706 = vadd.f32 %v607, %v674
      %v707 = vadd.f32 %v608, %v675
      %v708 = vadd.f32 %v609, %v676
      %v709 = vld [vmem:[%s610 + $0x1] sm:$0xff]
      %v710 = vld [vmem:[%s610 + $0x9] sm:$0xff]
      %v711 = vld [vmem:[%s610 + $0x19] sm:$0xff]
      %v712 = vld [vmem:[%s610 + $0x21] sm:$0xff]
      %v713 = vld [vmem:[%s610 + $0x31] sm:$0xff]
      %v714 = vld [vmem:[%s610 + $0x39] sm:$0xff]
      %v715 = vld [vmem:[%s610 + $0x49] sm:$0xff]
      %v716 = vld [vmem:[%s610 + $0x51] sm:$0xff]
      %v717 = vld [vmem:[%s610 + $0x61] sm:$0xff]
      %v718 = vld [vmem:[%s610 + $0x69] sm:$0xff]
      %v719 = vld [vmem:[%s610 + $0x79] sm:$0xff]
      %v720 = vld [vmem:[%s610 + $0x81] sm:$0xff]
      %v721 = vld [vmem:[%s610 + $0x91] sm:$0xff]
      %v722 = vld [vmem:[%s610 + $0x99] sm:$0xff]
      %v723 = vld [vmem:[%s610 + $0xa9] sm:$0xff]
      %v724 = vld [vmem:[%s610 + $0xb1] sm:$0xff]
      %v725 = vld [vmem:[%s610 + $0xc1] sm:$0xff]
      %v726 = vld [vmem:[%s610 + $0xc9] sm:$0xff]
      %v727 = vld [vmem:[%s610 + $0xd9] sm:$0xff]
      %v728 = vld [vmem:[%s610 + $0xe1] sm:$0xff]
      %v729 = vld [vmem:[%s610 + $0xf1] sm:$0xff]
      %v730 = vld [vmem:[%s610 + $0xf9] sm:$0xff]
      %v731 = vld [vmem:[%s610 + $0x109] sm:$0xff]
      %v732 = vld [vmem:[%s610 + $0x111] sm:$0xff]
      %v733 = vld [vmem:[%s610 + $0x121] sm:$0xff]
      %v734 = vld [vmem:[%s610 + $0x129] sm:$0xff]
      %v735 = vld [vmem:[%s610 + $0x139] sm:$0xff]
      %v736 = vld [vmem:[%s610 + $0x141] sm:$0xff]
      %v737 = vld [vmem:[%s610 + $0x151] sm:$0xff]
      %v738 = vld [vmem:[%s610 + $0x159] sm:$0xff]
      %v739 = vld [vmem:[%s610 + $0x169] sm:$0xff]
      %v740 = vld [vmem:[%s610 + $0x171] sm:$0xff]
      %v741 = vld [vmem:[%s1 + $0x4] sm:$0x1]
      %v742 = vperm.slane %v741, 0
      %v743 = vmul.f32 %v709, %v742
      %v744 = vmul.f32 %v710, %v742
      %v745 = vmul.f32 %v711, %v742
      %v746 = vmul.f32 %v712, %v742
      %v747 = vmul.f32 %v713, %v742
      %v748 = vmul.f32 %v714, %v742
      %v749 = vmul.f32 %v715, %v742
      %v750 = vmul.f32 %v716, %v742
      %v751 = vmul.f32 %v717, %v742
      %v752 = vmul.f32 %v718, %v742
      %v753 = vmul.f32 %v719, %v742
      %v754 = vmul.f32 %v720, %v742
      %v755 = vmul.f32 %v721, %v742
      %v756 = vmul.f32 %v722, %v742
      %v757 = vmul.f32 %v723, %v742
      %v758 = vmul.f32 %v724, %v742
      %v759 = vmul.f32 %v725, %v742
      %v760 = vmul.f32 %v726, %v742
      %v761 = vmul.f32 %v727, %v742
      %v762 = vmul.f32 %v728, %v742
      %v763 = vmul.f32 %v729, %v742
      %v764 = vmul.f32 %v730, %v742
      %v765 = vmul.f32 %v731, %v742
      %v766 = vmul.f32 %v732, %v742
      %v767 = vmul.f32 %v733, %v742
      %v768 = vmul.f32 %v734, %v742
      %v769 = vmul.f32 %v735, %v742
      %v770 = vmul.f32 %v736, %v742
      %v771 = vmul.f32 %v737, %v742
      %v772 = vmul.f32 %v738, %v742
      %v773 = vmul.f32 %v739, %v742
      %v774 = vmul.f32 %v740, %v742
      %v775 = vadd.f32 %v677, %v743
      %v776 = vadd.f32 %v678, %v744
      %v777 = vadd.f32 %v679, %v745
      %v778 = vadd.f32 %v680, %v746
      %v779 = vadd.f32 %v681, %v747
      %v780 = vadd.f32 %v682, %v748
      %v781 = vadd.f32 %v683, %v749
      %v782 = vadd.f32 %v684, %v750
      %v783 = vadd.f32 %v685, %v751
      %v784 = vadd.f32 %v686, %v752
      %v785 = vadd.f32 %v687, %v753
      %v786 = vadd.f32 %v688, %v754
      %v787 = vadd.f32 %v689, %v755
      %v788 = vadd.f32 %v690, %v756
      %v789 = vadd.f32 %v691, %v757
      %v790 = vadd.f32 %v692, %v758
      %v791 = vadd.f32 %v693, %v759
      %v792 = vadd.f32 %v694, %v760
      %v793 = vadd.f32 %v695, %v761
      %v794 = vadd.f32 %v696, %v762
      %v795 = vadd.f32 %v697, %v763
      %v796 = vadd.f32 %v698, %v764
      %v797 = vadd.f32 %v699, %v765
      %v798 = vadd.f32 %v700, %v766
      %v799 = vadd.f32 %v701, %v767
      %v800 = vadd.f32 %v702, %v768
      %v801 = vadd.f32 %v703, %v769
      %v802 = vadd.f32 %v704, %v770
      %v803 = vadd.f32 %v705, %v771
      %v804 = vadd.f32 %v706, %v772
      %v805 = vadd.f32 %v707, %v773
      %v806 = vadd.f32 %v708, %v774
      %v807 = vld [vmem:[%s610 + $0x2] sm:$0xff]
      %v808 = vld [vmem:[%s610 + $0xa] sm:$0xff]
      %v809 = vld [vmem:[%s610 + $0x1a] sm:$0xff]
      %v810 = vld [vmem:[%s610 + $0x22] sm:$0xff]
      %v811 = vld [vmem:[%s610 + $0x32] sm:$0xff]
      %v812 = vld [vmem:[%s610 + $0x3a] sm:$0xff]
      %v813 = vld [vmem:[%s610 + $0x4a] sm:$0xff]
      %v814 = vld [vmem:[%s610 + $0x52] sm:$0xff]
      %v815 = vld [vmem:[%s610 + $0x62] sm:$0xff]
      %v816 = vld [vmem:[%s610 + $0x6a] sm:$0xff]
      %v817 = vld [vmem:[%s610 + $0x7a] sm:$0xff]
      %v818 = vld [vmem:[%s610 + $0x82] sm:$0xff]
      %v819 = vld [vmem:[%s610 + $0x92] sm:$0xff]
      %v820 = vld [vmem:[%s610 + $0x9a] sm:$0xff]
      %v821 = vld [vmem:[%s610 + $0xaa] sm:$0xff]
      %v822 = vld [vmem:[%s610 + $0xb2] sm:$0xff]
      %v823 = vld [vmem:[%s610 + $0xc2] sm:$0xff]
      %v824 = vld [vmem:[%s610 + $0xca] sm:$0xff]
      %v825 = vld [vmem:[%s610 + $0xda] sm:$0xff]
      %v826 = vld [vmem:[%s610 + $0xe2] sm:$0xff]
      %v827 = vld [vmem:[%s610 + $0xf2] sm:$0xff]
      %v828 = vld [vmem:[%s610 + $0xfa] sm:$0xff]
      %v829 = vld [vmem:[%s610 + $0x10a] sm:$0xff]
      %v830 = vld [vmem:[%s610 + $0x112] sm:$0xff]
      %v831 = vld [vmem:[%s610 + $0x122] sm:$0xff]
      %v832 = vld [vmem:[%s610 + $0x12a] sm:$0xff]
      %v833 = vld [vmem:[%s610 + $0x13a] sm:$0xff]
      %v834 = vld [vmem:[%s610 + $0x142] sm:$0xff]
      %v835 = vld [vmem:[%s610 + $0x152] sm:$0xff]
      %v836 = vld [vmem:[%s610 + $0x15a] sm:$0xff]
      %v837 = vld [vmem:[%s610 + $0x16a] sm:$0xff]
      %v838 = vld [vmem:[%s610 + $0x172] sm:$0xff]
      %v839 = vld [vmem:[%s1 + $0x5] sm:$0x1]
      %v840 = vperm.slane %v839, 0
      %v841 = vmul.f32 %v807, %v840
      %v842 = vmul.f32 %v808, %v840
      %v843 = vmul.f32 %v809, %v840
      %v844 = vmul.f32 %v810, %v840
      %v845 = vmul.f32 %v811, %v840
      %v846 = vmul.f32 %v812, %v840
      %v847 = vmul.f32 %v813, %v840
      %v848 = vmul.f32 %v814, %v840
      %v849 = vmul.f32 %v815, %v840
      %v850 = vmul.f32 %v816, %v840
      %v851 = vmul.f32 %v817, %v840
      %v852 = vmul.f32 %v818, %v840
      %v853 = vmul.f32 %v819, %v840
      %v854 = vmul.f32 %v820, %v840
      %v855 = vmul.f32 %v821, %v840
      %v856 = vmul.f32 %v822, %v840
      %v857 = vmul.f32 %v823, %v840
      %v858 = vmul.f32 %v824, %v840
      %v859 = vmul.f32 %v825, %v840
      %v860 = vmul.f32 %v826, %v840
      %v861 = vmul.f32 %v827, %v840
      %v862 = vmul.f32 %v828, %v840
      %v863 = vmul.f32 %v829, %v840
      %v864 = vmul.f32 %v830, %v840
      %v865 = vmul.f32 %v831, %v840
      %v866 = vmul.f32 %v832, %v840
      %v867 = vmul.f32 %v833, %v840
      %v868 = vmul.f32 %v834, %v840
      %v869 = vmul.f32 %v835, %v840
      %v870 = vmul.f32 %v836, %v840
      %v871 = vmul.f32 %v837, %v840
      %v872 = vmul.f32 %v838, %v840
      %v873 = vadd.f32 %v775, %v841
      %v874 = vadd.f32 %v776, %v842
      %v875 = vadd.f32 %v777, %v843
      %v876 = vadd.f32 %v778, %v844
      %v877 = vadd.f32 %v779, %v845
      %v878 = vadd.f32 %v780, %v846
      %v879 = vadd.f32 %v781, %v847
      %v880 = vadd.f32 %v782, %v848
      %v881 = vadd.f32 %v783, %v849
      %v882 = vadd.f32 %v784, %v850
      %v883 = vadd.f32 %v785, %v851
      %v884 = vadd.f32 %v786, %v852
      %v885 = vadd.f32 %v787, %v853
      %v886 = vadd.f32 %v788, %v854
      %v887 = vadd.f32 %v789, %v855
      %v888 = vadd.f32 %v790, %v856
      %v889 = vadd.f32 %v791, %v857
      %v890 = vadd.f32 %v792, %v858
      %v891 = vadd.f32 %v793, %v859
      %v892 = vadd.f32 %v794, %v860
      %v893 = vadd.f32 %v795, %v861
      %v894 = vadd.f32 %v796, %v862
      %v895 = vadd.f32 %v797, %v863
      %v896 = vadd.f32 %v798, %v864
      %v897 = vadd.f32 %v799, %v865
      %v898 = vadd.f32 %v800, %v866
      %v899 = vadd.f32 %v801, %v867
      %v900 = vadd.f32 %v802, %v868
      %v901 = vadd.f32 %v803, %v869
      %v902 = vadd.f32 %v804, %v870
      %v903 = vadd.f32 %v805, %v871
      %v904 = vadd.f32 %v806, %v872
      %s905 = scalar_lea.vmem %s306, 48
      %v906 = vld [vmem:[%s905] sm:$0xff]
      %v907 = vld [vmem:[%s905 + $0x8] sm:$0xff]
      %v908 = vld [vmem:[%s905 + $0x18] sm:$0xff]
      %v909 = vld [vmem:[%s905 + $0x20] sm:$0xff]
      %v910 = vld [vmem:[%s905 + $0x30] sm:$0xff]
      %v911 = vld [vmem:[%s905 + $0x38] sm:$0xff]
      %v912 = vld [vmem:[%s905 + $0x48] sm:$0xff]
      %v913 = vld [vmem:[%s905 + $0x50] sm:$0xff]
      %v914 = vld [vmem:[%s905 + $0x60] sm:$0xff]
      %v915 = vld [vmem:[%s905 + $0x68] sm:$0xff]
      %v916 = vld [vmem:[%s905 + $0x78] sm:$0xff]
      %v917 = vld [vmem:[%s905 + $0x80] sm:$0xff]
      %v918 = vld [vmem:[%s905 + $0x90] sm:$0xff]
      %v919 = vld [vmem:[%s905 + $0x98] sm:$0xff]
      %v920 = vld [vmem:[%s905 + $0xa8] sm:$0xff]
      %v921 = vld [vmem:[%s905 + $0xb0] sm:$0xff]
      %v922 = vld [vmem:[%s905 + $0xc0] sm:$0xff]
      %v923 = vld [vmem:[%s905 + $0xc8] sm:$0xff]
      %v924 = vld [vmem:[%s905 + $0xd8] sm:$0xff]
      %v925 = vld [vmem:[%s905 + $0xe0] sm:$0xff]
      %v926 = vld [vmem:[%s905 + $0xf0] sm:$0xff]
      %v927 = vld [vmem:[%s905 + $0xf8] sm:$0xff]
      %v928 = vld [vmem:[%s905 + $0x108] sm:$0xff]
      %v929 = vld [vmem:[%s905 + $0x110] sm:$0xff]
      %v930 = vld [vmem:[%s905 + $0x120] sm:$0xff]
      %v931 = vld [vmem:[%s905 + $0x128] sm:$0xff]
      %v932 = vld [vmem:[%s905 + $0x138] sm:$0xff]
      %v933 = vld [vmem:[%s905 + $0x140] sm:$0xff]
      %v934 = vld [vmem:[%s905 + $0x150] sm:$0xff]
      %v935 = vld [vmem:[%s905 + $0x158] sm:$0xff]
      %v936 = vld [vmem:[%s905 + $0x168] sm:$0xff]
      %v937 = vld [vmem:[%s905 + $0x170] sm:$0xff]
      %v938 = vld [vmem:[%s1 + $0x6] sm:$0x1]
      %v939 = vperm.slane %v938, 0
      %v940 = vmul.f32 %v906, %v939
      %v941 = vmul.f32 %v907, %v939
      %v942 = vmul.f32 %v908, %v939
      %v943 = vmul.f32 %v909, %v939
      %v944 = vmul.f32 %v910, %v939
      %v945 = vmul.f32 %v911, %v939
      %v946 = vmul.f32 %v912, %v939
      %v947 = vmul.f32 %v913, %v939
      %v948 = vmul.f32 %v914, %v939
      %v949 = vmul.f32 %v915, %v939
      %v950 = vmul.f32 %v916, %v939
      %v951 = vmul.f32 %v917, %v939
      %v952 = vmul.f32 %v918, %v939
      %v953 = vmul.f32 %v919, %v939
      %v954 = vmul.f32 %v920, %v939
      %v955 = vmul.f32 %v921, %v939
      %v956 = vmul.f32 %v922, %v939
      %v957 = vmul.f32 %v923, %v939
      %v958 = vmul.f32 %v924, %v939
      %v959 = vmul.f32 %v925, %v939
      %v960 = vmul.f32 %v926, %v939
      %v961 = vmul.f32 %v927, %v939
      %v962 = vmul.f32 %v928, %v939
      %v963 = vmul.f32 %v929, %v939
      %v964 = vmul.f32 %v930, %v939
      %v965 = vmul.f32 %v931, %v939
      %v966 = vmul.f32 %v932, %v939
      %v967 = vmul.f32 %v933, %v939
      %v968 = vmul.f32 %v934, %v939
      %v969 = vmul.f32 %v935, %v939
      %v970 = vmul.f32 %v936, %v939
      %v971 = vmul.f32 %v937, %v939
      %v972 = vadd.f32 %v873, %v940
      %v973 = vadd.f32 %v874, %v941
      %v974 = vadd.f32 %v875, %v942
      %v975 = vadd.f32 %v876, %v943
      %v976 = vadd.f32 %v877, %v944
      %v977 = vadd.f32 %v878, %v945
      %v978 = vadd.f32 %v879, %v946
      %v979 = vadd.f32 %v880, %v947
      %v980 = vadd.f32 %v881, %v948
      %v981 = vadd.f32 %v882, %v949
      %v982 = vadd.f32 %v883, %v950
      %v983 = vadd.f32 %v884, %v951
      %v984 = vadd.f32 %v885, %v952
      %v985 = vadd.f32 %v886, %v953
      %v986 = vadd.f32 %v887, %v954
      %v987 = vadd.f32 %v888, %v955
      %v988 = vadd.f32 %v889, %v956
      %v989 = vadd.f32 %v890, %v957
      %v990 = vadd.f32 %v891, %v958
      %v991 = vadd.f32 %v892, %v959
      %v992 = vadd.f32 %v893, %v960
      %v993 = vadd.f32 %v894, %v961
      %v994 = vadd.f32 %v895, %v962
      %v995 = vadd.f32 %v896, %v963
      %v996 = vadd.f32 %v897, %v964
      %v997 = vadd.f32 %v898, %v965
      %v998 = vadd.f32 %v899, %v966
      %v999 = vadd.f32 %v900, %v967
      %v1000 = vadd.f32 %v901, %v968
      %v1001 = vadd.f32 %v902, %v969
      %v1002 = vadd.f32 %v903, %v970
      %v1003 = vadd.f32 %v904, %v971
      %v1004 = vld [vmem:[%s905 + $0x1] sm:$0xff]
      %v1005 = vld [vmem:[%s905 + $0x9] sm:$0xff]
      %v1006 = vld [vmem:[%s905 + $0x19] sm:$0xff]
      %v1007 = vld [vmem:[%s905 + $0x21] sm:$0xff]
      %v1008 = vld [vmem:[%s905 + $0x31] sm:$0xff]
      %v1009 = vld [vmem:[%s905 + $0x39] sm:$0xff]
      %v1010 = vld [vmem:[%s905 + $0x49] sm:$0xff]
      %v1011 = vld [vmem:[%s905 + $0x51] sm:$0xff]
      %v1012 = vld [vmem:[%s905 + $0x61] sm:$0xff]
      %v1013 = vld [vmem:[%s905 + $0x69] sm:$0xff]
      %v1014 = vld [vmem:[%s905 + $0x79] sm:$0xff]
      %v1015 = vld [vmem:[%s905 + $0x81] sm:$0xff]
      %v1016 = vld [vmem:[%s905 + $0x91] sm:$0xff]
      %v1017 = vld [vmem:[%s905 + $0x99] sm:$0xff]
      %v1018 = vld [vmem:[%s905 + $0xa9] sm:$0xff]
      %v1019 = vld [vmem:[%s905 + $0xb1] sm:$0xff]
      %v1020 = vld [vmem:[%s905 + $0xc1] sm:$0xff]
      %v1021 = vld [vmem:[%s905 + $0xc9] sm:$0xff]
      %v1022 = vld [vmem:[%s905 + $0xd9] sm:$0xff]
      %v1023 = vld [vmem:[%s905 + $0xe1] sm:$0xff]
      %v1024 = vld [vmem:[%s905 + $0xf1] sm:$0xff]
      %v1025 = vld [vmem:[%s905 + $0xf9] sm:$0xff]
      %v1026 = vld [vmem:[%s905 + $0x109] sm:$0xff]
      %v1027 = vld [vmem:[%s905 + $0x111] sm:$0xff]
      %v1028 = vld [vmem:[%s905 + $0x121] sm:$0xff]
      %v1029 = vld [vmem:[%s905 + $0x129] sm:$0xff]
      %v1030 = vld [vmem:[%s905 + $0x139] sm:$0xff]
      %v1031 = vld [vmem:[%s905 + $0x141] sm:$0xff]
      %v1032 = vld [vmem:[%s905 + $0x151] sm:$0xff]
      %v1033 = vld [vmem:[%s905 + $0x159] sm:$0xff]
      %v1034 = vld [vmem:[%s905 + $0x169] sm:$0xff]
      %v1035 = vld [vmem:[%s905 + $0x171] sm:$0xff]
      %v1036 = vld [vmem:[%s1 + $0x7] sm:$0x1]
      %v1037 = vperm.slane %v1036, 0
      %v1038 = vmul.f32 %v1004, %v1037
      %v1039 = vmul.f32 %v1005, %v1037
      %v1040 = vmul.f32 %v1006, %v1037
      %v1041 = vmul.f32 %v1007, %v1037
      %v1042 = vmul.f32 %v1008, %v1037
      %v1043 = vmul.f32 %v1009, %v1037
      %v1044 = vmul.f32 %v1010, %v1037
      %v1045 = vmul.f32 %v1011, %v1037
      %v1046 = vmul.f32 %v1012, %v1037
      %v1047 = vmul.f32 %v1013, %v1037
      %v1048 = vmul.f32 %v1014, %v1037
      %v1049 = vmul.f32 %v1015, %v1037
      %v1050 = vmul.f32 %v1016, %v1037
      %v1051 = vmul.f32 %v1017, %v1037
      %v1052 = vmul.f32 %v1018, %v1037
      %v1053 = vmul.f32 %v1019, %v1037
      %v1054 = vmul.f32 %v1020, %v1037
      %v1055 = vmul.f32 %v1021, %v1037
      %v1056 = vmul.f32 %v1022, %v1037
      %v1057 = vmul.f32 %v1023, %v1037
      %v1058 = vmul.f32 %v1024, %v1037
      %v1059 = vmul.f32 %v1025, %v1037
      %v1060 = vmul.f32 %v1026, %v1037
      %v1061 = vmul.f32 %v1027, %v1037
      %v1062 = vmul.f32 %v1028, %v1037
      %v1063 = vmul.f32 %v1029, %v1037
      %v1064 = vmul.f32 %v1030, %v1037
      %v1065 = vmul.f32 %v1031, %v1037
      %v1066 = vmul.f32 %v1032, %v1037
      %v1067 = vmul.f32 %v1033, %v1037
      %v1068 = vmul.f32 %v1034, %v1037
      %v1069 = vmul.f32 %v1035, %v1037
      %v1070 = vadd.f32 %v972, %v1038
      %v1071 = vadd.f32 %v973, %v1039
      %v1072 = vadd.f32 %v974, %v1040
      %v1073 = vadd.f32 %v975, %v1041
      %v1074 = vadd.f32 %v976, %v1042
      %v1075 = vadd.f32 %v977, %v1043
      %v1076 = vadd.f32 %v978, %v1044
      %v1077 = vadd.f32 %v979, %v1045
      %v1078 = vadd.f32 %v980, %v1046
      %v1079 = vadd.f32 %v981, %v1047
      %v1080 = vadd.f32 %v982, %v1048
      %v1081 = vadd.f32 %v983, %v1049
      %v1082 = vadd.f32 %v984, %v1050
      %v1083 = vadd.f32 %v985, %v1051
      %v1084 = vadd.f32 %v986, %v1052
      %v1085 = vadd.f32 %v987, %v1053
      %v1086 = vadd.f32 %v988, %v1054
      %v1087 = vadd.f32 %v989, %v1055
      %v1088 = vadd.f32 %v990, %v1056
      %v1089 = vadd.f32 %v991, %v1057
      %v1090 = vadd.f32 %v992, %v1058
      %v1091 = vadd.f32 %v993, %v1059
      %v1092 = vadd.f32 %v994, %v1060
      %v1093 = vadd.f32 %v995, %v1061
      %v1094 = vadd.f32 %v996, %v1062
      %v1095 = vadd.f32 %v997, %v1063
      %v1096 = vadd.f32 %v998, %v1064
      %v1097 = vadd.f32 %v999, %v1065
      %v1098 = vadd.f32 %v1000, %v1066
      %v1099 = vadd.f32 %v1001, %v1067
      %v1100 = vadd.f32 %v1002, %v1068
      %v1101 = vadd.f32 %v1003, %v1069
      %v1102 = vld [vmem:[%s905 + $0x2] sm:$0xff]
      %v1103 = vld [vmem:[%s905 + $0xa] sm:$0xff]
      %v1104 = vld [vmem:[%s905 + $0x1a] sm:$0xff]
      %v1105 = vld [vmem:[%s905 + $0x22] sm:$0xff]
      %v1106 = vld [vmem:[%s905 + $0x32] sm:$0xff]
      %v1107 = vld [vmem:[%s905 + $0x3a] sm:$0xff]
      %v1108 = vld [vmem:[%s905 + $0x4a] sm:$0xff]
      %v1109 = vld [vmem:[%s905 + $0x52] sm:$0xff]
      %v1110 = vld [vmem:[%s905 + $0x62] sm:$0xff]
      %v1111 = vld [vmem:[%s905 + $0x6a] sm:$0xff]
      %v1112 = vld [vmem:[%s905 + $0x7a] sm:$0xff]
      %v1113 = vld [vmem:[%s905 + $0x82] sm:$0xff]
      %v1114 = vld [vmem:[%s905 + $0x92] sm:$0xff]
      %v1115 = vld [vmem:[%s905 + $0x9a] sm:$0xff]
      %v1116 = vld [vmem:[%s905 + $0xaa] sm:$0xff]
      %v1117 = vld [vmem:[%s905 + $0xb2] sm:$0xff]
      %v1118 = vld [vmem:[%s905 + $0xc2] sm:$0xff]
      %v1119 = vld [vmem:[%s905 + $0xca] sm:$0xff]
      %v1120 = vld [vmem:[%s905 + $0xda] sm:$0xff]
      %v1121 = vld [vmem:[%s905 + $0xe2] sm:$0xff]
      %v1122 = vld [vmem:[%s905 + $0xf2] sm:$0xff]
      %v1123 = vld [vmem:[%s905 + $0xfa] sm:$0xff]
      %v1124 = vld [vmem:[%s905 + $0x10a] sm:$0xff]
      %v1125 = vld [vmem:[%s905 + $0x112] sm:$0xff]
      %v1126 = vld [vmem:[%s905 + $0x122] sm:$0xff]
      %v1127 = vld [vmem:[%s905 + $0x12a] sm:$0xff]
      %v1128 = vld [vmem:[%s905 + $0x13a] sm:$0xff]
      %v1129 = vld [vmem:[%s905 + $0x142] sm:$0xff]
      %v1130 = vld [vmem:[%s905 + $0x152] sm:$0xff]
      %v1131 = vld [vmem:[%s905 + $0x15a] sm:$0xff]
      %v1132 = vld [vmem:[%s905 + $0x16a] sm:$0xff]
      %v1133 = vld [vmem:[%s905 + $0x172] sm:$0xff]
      %v1134 = vld [vmem:[%s1 + $0x8] sm:$0x1]
      %v1135 = vperm.slane %v1134, 0
      %v1136 = vmul.f32 %v1102, %v1135
      %v1137 = vmul.f32 %v1103, %v1135
      %v1138 = vmul.f32 %v1104, %v1135
      %v1139 = vmul.f32 %v1105, %v1135
      %v1140 = vmul.f32 %v1106, %v1135
      %v1141 = vmul.f32 %v1107, %v1135
      %v1142 = vmul.f32 %v1108, %v1135
      %v1143 = vmul.f32 %v1109, %v1135
      %v1144 = vmul.f32 %v1110, %v1135
      %v1145 = vmul.f32 %v1111, %v1135
      %v1146 = vmul.f32 %v1112, %v1135
      %v1147 = vmul.f32 %v1113, %v1135
      %v1148 = vmul.f32 %v1114, %v1135
      %v1149 = vmul.f32 %v1115, %v1135
      %v1150 = vmul.f32 %v1116, %v1135
      %v1151 = vmul.f32 %v1117, %v1135
      %v1152 = vmul.f32 %v1118, %v1135
      %v1153 = vmul.f32 %v1119, %v1135
      %v1154 = vmul.f32 %v1120, %v1135
      %v1155 = vmul.f32 %v1121, %v1135
      %v1156 = vmul.f32 %v1122, %v1135
      %v1157 = vmul.f32 %v1123, %v1135
      %v1158 = vmul.f32 %v1124, %v1135
      %v1159 = vmul.f32 %v1125, %v1135
      %v1160 = vmul.f32 %v1126, %v1135
      %v1161 = vmul.f32 %v1127, %v1135
      %v1162 = vmul.f32 %v1128, %v1135
      %v1163 = vmul.f32 %v1129, %v1135
      %v1164 = vmul.f32 %v1130, %v1135
      %v1165 = vmul.f32 %v1131, %v1135
      %v1166 = vmul.f32 %v1132, %v1135
      %v1167 = vmul.f32 %v1133, %v1135
      %v1168 = vadd.f32 %v1070, %v1136
      %v1169 = vadd.f32 %v1071, %v1137
      %v1170 = vadd.f32 %v1072, %v1138
      %v1171 = vadd.f32 %v1073, %v1139
      %v1172 = vadd.f32 %v1074, %v1140
      %v1173 = vadd.f32 %v1075, %v1141
      %v1174 = vadd.f32 %v1076, %v1142
      %v1175 = vadd.f32 %v1077, %v1143
      %v1176 = vadd.f32 %v1078, %v1144
      %v1177 = vadd.f32 %v1079, %v1145
      %v1178 = vadd.f32 %v1080, %v1146
      %v1179 = vadd.f32 %v1081, %v1147
      %v1180 = vadd.f32 %v1082, %v1148
      %v1181 = vadd.f32 %v1083, %v1149
      %v1182 = vadd.f32 %v1084, %v1150
      %v1183 = vadd.f32 %v1085, %v1151
      %v1184 = vadd.f32 %v1086, %v1152
      %v1185 = vadd.f32 %v1087, %v1153
      %v1186 = vadd.f32 %v1088, %v1154
      %v1187 = vadd.f32 %v1089, %v1155
      %v1188 = vadd.f32 %v1090, %v1156
      %v1189 = vadd.f32 %v1091, %v1157
      %v1190 = vadd.f32 %v1092, %v1158
      %v1191 = vadd.f32 %v1093, %v1159
      %v1192 = vadd.f32 %v1094, %v1160
      %v1193 = vadd.f32 %v1095, %v1161
      %v1194 = vadd.f32 %v1096, %v1162
      %v1195 = vadd.f32 %v1097, %v1163
      %v1196 = vadd.f32 %v1098, %v1164
      %v1197 = vadd.f32 %v1099, %v1165
      %v1198 = vadd.f32 %v1100, %v1166
      %v1199 = vadd.f32 %v1101, %v1167
      %v1200 = vld [vmem:[%s2] sm:$0x1]
      %v1202 = vperm.slane %v1200, 0
      %v1204 = vadd.f32 %v1168, %v1202
      %v1205 = vadd.f32 %v1169, %v1202
      %v1206 = vadd.f32 %v1170, %v1202
      %v1207 = vadd.f32 %v1171, %v1202
      %v1208 = vadd.f32 %v1172, %v1202
      %v1209 = vadd.f32 %v1173, %v1202
      %v1210 = vadd.f32 %v1174, %v1202
      %v1211 = vadd.f32 %v1175, %v1202
      %v1212 = vadd.f32 %v1176, %v1202
      %v1213 = vadd.f32 %v1177, %v1202
      %v1214 = vadd.f32 %v1178, %v1202
      %v1215 = vadd.f32 %v1179, %v1202
      %v1216 = vadd.f32 %v1180, %v1202
      %v1217 = vadd.f32 %v1181, %v1202
      %v1218 = vadd.f32 %v1182, %v1202
      %v1219 = vadd.f32 %v1183, %v1202
      %v1220 = vadd.f32 %v1184, %v1202
      %v1221 = vadd.f32 %v1185, %v1202
      %v1222 = vadd.f32 %v1186, %v1202
      %v1223 = vadd.f32 %v1187, %v1202
      %v1224 = vadd.f32 %v1188, %v1202
      %v1225 = vadd.f32 %v1189, %v1202
      %v1226 = vadd.f32 %v1190, %v1202
      %v1227 = vadd.f32 %v1191, %v1202
      %v1228 = vadd.f32 %v1192, %v1202
      %v1229 = vadd.f32 %v1193, %v1202
      %v1230 = vadd.f32 %v1194, %v1202
      %v1231 = vadd.f32 %v1195, %v1202
      %v1232 = vadd.f32 %v1196, %v1202
      %v1233 = vadd.f32 %v1197, %v1202
      %v1234 = vadd.f32 %v1198, %v1202
      %v1235 = vadd.f32 %v1199, %v1202
      %v1236 = vmax.f32 %v1204, 0.0
      %v1237 = vmax.f32 %v1205, 0.0
      %v1238 = vmax.f32 %v1206, 0.0
      %v1239 = vmax.f32 %v1207, 0.0
      %v1240 = vmax.f32 %v1208, 0.0
      %v1241 = vmax.f32 %v1209, 0.0
      %v1242 = vmax.f32 %v1210, 0.0
      %v1243 = vmax.f32 %v1211, 0.0
      %v1244 = vmax.f32 %v1212, 0.0
      %v1245 = vmax.f32 %v1213, 0.0
      %v1246 = vmax.f32 %v1214, 0.0
      %v1247 = vmax.f32 %v1215, 0.0
      %v1248 = vmax.f32 %v1216, 0.0
      %v1249 = vmax.f32 %v1217, 0.0
      %v1250 = vmax.f32 %v1218, 0.0
      %v1251 = vmax.f32 %v1219, 0.0
      %v1252 = vmax.f32 %v1220, 0.0
      %v1253 = vmax.f32 %v1221, 0.0
      %v1254 = vmax.f32 %v1222, 0.0
      %v1255 = vmax.f32 %v1223, 0.0
      %v1256 = vmax.f32 %v1224, 0.0
      %v1257 = vmax.f32 %v1225, 0.0
      %v1258 = vmax.f32 %v1226, 0.0
      %v1259 = vmax.f32 %v1227, 0.0
      %v1260 = vmax.f32 %v1228, 0.0
      %v1261 = vmax.f32 %v1229, 0.0
      %v1262 = vmax.f32 %v1230, 0.0
      %v1263 = vmax.f32 %v1231, 0.0
      %v1264 = vmax.f32 %v1232, 0.0
      %v1265 = vmax.f32 %v1233, 0.0
      %v1266 = vmax.f32 %v1234, 0.0
      %v1267 = vmax.f32 %v1235, 0.0
      %vm1268 = vcmask 64512
      %v1269 = vsel %vm1268, %v1236, 0.0
      %v1270 = vsel %vm1268, %v1237, 0.0
      %v1271 = vadd.f32 %v1269, %v1270
      %v1272 = vsel %vm1268, %v1238, 0.0
      %v1273 = vadd.f32 %v1271, %v1272
      %v1274 = vsel %vm1268, %v1239, 0.0
      %v1275 = vadd.f32 %v1273, %v1274
      %v1276 = vsel %vm1268, %v1240, 0.0
      %v1277 = vadd.f32 %v1275, %v1276
      %v1278 = vsel %vm1268, %v1241, 0.0
      %v1279 = vadd.f32 %v1277, %v1278
      %v1280 = vsel %vm1268, %v1242, 0.0
      %v1281 = vadd.f32 %v1279, %v1280
      %v1282 = vsel %vm1268, %v1243, 0.0
      %v1283 = vadd.f32 %v1281, %v1282
      %v1284 = vsel %vm1268, %v1244, 0.0
      %v1285 = vadd.f32 %v1283, %v1284
      %v1286 = vsel %vm1268, %v1245, 0.0
      %v1287 = vadd.f32 %v1285, %v1286
      %v1288 = vsel %vm1268, %v1246, 0.0
      %v1289 = vadd.f32 %v1287, %v1288
      %v1290 = vsel %vm1268, %v1247, 0.0
      %v1291 = vadd.f32 %v1289, %v1290
      %v1292 = vsel %vm1268, %v1248, 0.0
      %v1293 = vadd.f32 %v1291, %v1292
      %v1294 = vsel %vm1268, %v1249, 0.0
      %v1295 = vadd.f32 %v1293, %v1294
      %v1296 = vsel %vm1268, %v1250, 0.0
      %v1297 = vadd.f32 %v1295, %v1296
      %v1298 = vsel %vm1268, %v1251, 0.0
      %v1299 = vadd.f32 %v1297, %v1298
      %v1300 = vsel %vm1268, %v1252, 0.0
      %v1301 = vadd.f32 %v1299, %v1300
      %v1302 = vsel %vm1268, %v1253, 0.0
      %v1303 = vadd.f32 %v1301, %v1302
      %v1304 = vsel %vm1268, %v1254, 0.0
      %v1305 = vadd.f32 %v1303, %v1304
      %v1306 = vsel %vm1268, %v1255, 0.0
      %v1307 = vadd.f32 %v1305, %v1306
      %v1308 = vsel %vm1268, %v1256, 0.0
      %v1309 = vadd.f32 %v1307, %v1308
      %v1310 = vsel %vm1268, %v1257, 0.0
      %v1311 = vadd.f32 %v1309, %v1310
      %v1312 = vsel %vm1268, %v1258, 0.0
      %v1313 = vadd.f32 %v1311, %v1312
      %v1314 = vsel %vm1268, %v1259, 0.0
      %v1315 = vadd.f32 %v1313, %v1314
      %v1316 = vsel %vm1268, %v1260, 0.0
      %v1317 = vadd.f32 %v1315, %v1316
      %v1318 = vsel %vm1268, %v1261, 0.0
      %v1319 = vadd.f32 %v1317, %v1318
      %v1320 = vsel %vm1268, %v1262, 0.0
      %v1321 = vadd.f32 %v1319, %v1320
      %v1322 = vsel %vm1268, %v1263, 0.0
      %v1323 = vadd.f32 %v1321, %v1322
      %v1324 = vsel %vm1268, %v1264, 0.0
      %v1325 = vadd.f32 %v1323, %v1324
      %v1326 = vsel %vm1268, %v1265, 0.0
      %v1327 = vadd.f32 %v1325, %v1326
      %v1328 = vsel %vm1268, %v1266, 0.0
      %v1329 = vadd.f32 %v1327, %v1328
      %v1330 = vsel %vm1268, %v1267, 0.0
      %v1331 = vadd.f32 %v1329, %v1330
      %v1332 = vrot.slane %v1331, 4
      %v1333 = vadd.f32 %v1331, %v1332
      %v1334 = vrot.slane %v1333, 2
      %v1335 = vadd.f32 %v1333, %v1334
      %v1336 = vrot.slane %v1335, 1
      %v1337 = vadd.f32 %v1335, %v1336
      %v1338 = vmul.f32 %v1337, 0.00390625
      %v1339 = vld [vmem:[%s3] sm:$0x3]
      %v1340 = vmul.f32 %v1338, %v1339
      %vm1341 = vcmask 58368
      %v1342 = vsel %vm1341, %v1340, 0.0
      %1343 = vadd.xlane.f32.xlu0 %v1342
      %v1344 = vpop.xlane.xlu0 %1343
      %v1345 = vld [vmem:[%s4] sm:$0x3]
      %v1346 = vadd.f32 %v1344, %v1345
      %v1347 = vmax.f32 %v1346, 0.0
      %v1348 = vld [vmem:[%s5] sm:$0x3]
      %1350 = vset.pattern.permute.xlu0 0
      %1351 = vperm.xlu0 %1350, %v1347
      %v1352 = vpop.permute.xlu0 %1351
      %v1354 = vmul.f32 %v1352, %v1348
      %v1355 = vsel %vm1341, %v1354, 0.0
      %v1356 = vrot.slane %v1355, 4
      %v1357 = vadd.f32 %v1355, %v1356
      %v1358 = vrot.slane %v1357, 2
      %v1359 = vadd.f32 %v1357, %v1358
      %v1360 = vrot.slane %v1359, 1
      %v1361 = vadd.f32 %v1359, %v1360
      %v1362 = vld [vmem:[%s6] sm:$0x1]
      %v1363 = vadd.f32 %v1361, %v1362
      %v1364 = vsub.f32 0.0, %v1363
      %v1365 = vmul.f32 %v1364, 1.442695
      %v1366 = vpow.pop %v1365
      %v1367 = vadd.f32 %v1366, 1.0
      %v1368 = vrcp.pop %v1367
      %v1369 = vmul.f32 %v1367, %v1368
      %v1370 = vsub.f32 1.0, %v1369
      %v1371 = vmul.f32 %v1368, %v1370
      %v1372 = vadd.f32 %v1368, %v1371
      %vm1373 = vweird.f32 %v1367
      %vm1374 = vweird.f32 %v1368
      %vm1375 = vmor %vm1373, %vm1374
      %v1376 = vsel %vm1375, %v1368, %v1372
      %v1377 = vand.u32 2147483647, %v1367
      %vm1378 = vcmp.eq.f32.partialorder %v1377, 8.507059e+37
      %v1379 = vand.u32 %v1367, 2147483648
      %v1380 = vor.u32 1.1754944e-38, %v1379
      %v1381 = vsel %vm1378, %v1380, %v1376
      %v1382 = vmul.f32 1.0, %v1381
      %1383 = vst [vmem:[%s311] sm:$0xf] 0
      %1384 = vst [vmem:[%s311 + $0x4] sm:$0xf] 0
      %1385 = vst [vmem:[%s311 + $0x8] sm:$0xf] 0
      %1386 = vst [vmem:[%s311 + $0xc] sm:$0xf] 0
      %1387 = vst [vmem:[%s311 + $0x10] sm:$0xf] 0
      %1388 = vst [vmem:[%s311 + $0x14] sm:$0xf] 0
      %1389 = vst [vmem:[%s311 + $0x18] sm:$0xf] 0
      %1390 = vst [vmem:[%s311 + $0x1c] sm:$0xf] 0
      %1391 = vst [vmem:[%s311 + $0x20] sm:$0xf] 0
      %1392 = vst [vmem:[%s311 + $0x24] sm:$0xf] 0
      %1393 = vst [vmem:[%s311 + $0x28] sm:$0xf] 0
      %1394 = vst [vmem:[%s311 + $0x2c] sm:$0xf] 0
      %1395 = vst [vmem:[%s311 + $0x30] sm:$0xf] 0
      %1396 = vst [vmem:[%s311 + $0x34] sm:$0xf] 0
      %1397 = vst [vmem:[%s311 + $0x38] sm:$0xf] 0
      %1398 = vst [vmem:[%s311 + $0x3c] sm:$0xf] 0
      %1399 = vst [vmem:[%s311 + $0x40] sm:$0xf] 0
      %1400 = vst [vmem:[%s311 + $0x44] sm:$0xf] 0
      %1401 = vst [vmem:[%s311 + $0x48] sm:$0xf] 0
      %1402 = vst [vmem:[%s311 + $0x4c] sm:$0xf] 0
      %1403 = vst [vmem:[%s311 + $0x50] sm:$0xf] 0
      %1404 = vst [vmem:[%s311 + $0x54] sm:$0xf] 0
      %1405 = vst [vmem:[%s311 + $0x58] sm:$0xf] 0
      %1406 = vst [vmem:[%s311 + $0x5c] sm:$0xf] 0
      %1407 = vst [vmem:[%s311 + $0x60] sm:$0xf] 0
      %1408 = vst [vmem:[%s311 + $0x64] sm:$0xf] 0
      %1409 = vst [vmem:[%s311 + $0x68] sm:$0xf] 0
      %1410 = vst [vmem:[%s311 + $0x6c] sm:$0xf] 0
      %1411 = vst [vmem:[%s311 + $0x70] sm:$0xf] 0
      %1412 = vst [vmem:[%s311 + $0x74] sm:$0xf] 0
      %1413 = vst [vmem:[%s311 + $0x78] sm:$0xf] 0
      %1414 = vst [vmem:[%s311 + $0x7c] sm:$0xf] 0
      %v1415 = vpack.c.bf16 %v1236, %v1236
      %v1416 = vpack.c.bf16 %v1237, %v1237
      %v1417 = vpack.c.bf16 %v1238, %v1238
      %v1418 = vpack.c.bf16 %v1239, %v1239
      %v1419 = vpack.c.bf16 %v1240, %v1240
      %v1420 = vpack.c.bf16 %v1241, %v1241
      %v1421 = vpack.c.bf16 %v1242, %v1242
      %v1422 = vpack.c.bf16 %v1243, %v1243
      %v1423 = vpack.c.bf16 %v1244, %v1244
      %v1424 = vpack.c.bf16 %v1245, %v1245
      %v1425 = vpack.c.bf16 %v1246, %v1246
      %v1426 = vpack.c.bf16 %v1247, %v1247
      %v1427 = vpack.c.bf16 %v1248, %v1248
      %v1428 = vpack.c.bf16 %v1249, %v1249
      %v1429 = vpack.c.bf16 %v1250, %v1250
      %v1430 = vpack.c.bf16 %v1251, %v1251
      %v1431 = vpack.c.bf16 %v1252, %v1252
      %v1432 = vpack.c.bf16 %v1253, %v1253
      %v1433 = vpack.c.bf16 %v1254, %v1254
      %v1434 = vpack.c.bf16 %v1255, %v1255
      %v1435 = vpack.c.bf16 %v1256, %v1256
      %v1436 = vpack.c.bf16 %v1257, %v1257
      %v1437 = vpack.c.bf16 %v1258, %v1258
      %v1438 = vpack.c.bf16 %v1259, %v1259
      %v1439 = vpack.c.bf16 %v1260, %v1260
      %v1440 = vpack.c.bf16 %v1261, %v1261
      %v1441 = vpack.c.bf16 %v1262, %v1262
      %v1442 = vpack.c.bf16 %v1263, %v1263
      %v1443 = vpack.c.bf16 %v1264, %v1264
      %v1444 = vpack.c.bf16 %v1265, %v1265
      %v1445 = vpack.c.bf16 %v1266, %v1266
      %v1446 = vpack.c.bf16 %v1267, %v1267
      %vm1447 = vcmask 60416
      %1448 = vst.msk [vmem:[%s311] sm:$0xf] %vm1447, %v1415
      %1449 = vst.msk [vmem:[%s311 + $0x4] sm:$0xf] %vm1447, %v1416
      %1450 = vst.msk [vmem:[%s311 + $0x8] sm:$0xf] %vm1447, %v1417
      %1451 = vst.msk [vmem:[%s311 + $0xc] sm:$0xf] %vm1447, %v1418
      %1452 = vst.msk [vmem:[%s311 + $0x10] sm:$0xf] %vm1447, %v1419
      %1453 = vst.msk [vmem:[%s311 + $0x14] sm:$0xf] %vm1447, %v1420
      %1454 = vst.msk [vmem:[%s311 + $0x18] sm:$0xf] %vm1447, %v1421
      %1455 = vst.msk [vmem:[%s311 + $0x1c] sm:$0xf] %vm1447, %v1422
      %1456 = vst.msk [vmem:[%s311 + $0x20] sm:$0xf] %vm1447, %v1423
      %1457 = vst.msk [vmem:[%s311 + $0x24] sm:$0xf] %vm1447, %v1424
      %1458 = vst.msk [vmem:[%s311 + $0x28] sm:$0xf] %vm1447, %v1425
      %1459 = vst.msk [vmem:[%s311 + $0x2c] sm:$0xf] %vm1447, %v1426
      %1460 = vst.msk [vmem:[%s311 + $0x30] sm:$0xf] %vm1447, %v1427
      %1461 = vst.msk [vmem:[%s311 + $0x34] sm:$0xf] %vm1447, %v1428
      %1462 = vst.msk [vmem:[%s311 + $0x38] sm:$0xf] %vm1447, %v1429
      %1463 = vst.msk [vmem:[%s311 + $0x3c] sm:$0xf] %vm1447, %v1430
      %1464 = vst.msk [vmem:[%s311 + $0x40] sm:$0xf] %vm1447, %v1431
      %1465 = vst.msk [vmem:[%s311 + $0x44] sm:$0xf] %vm1447, %v1432
      %1466 = vst.msk [vmem:[%s311 + $0x48] sm:$0xf] %vm1447, %v1433
      %1467 = vst.msk [vmem:[%s311 + $0x4c] sm:$0xf] %vm1447, %v1434
      %1468 = vst.msk [vmem:[%s311 + $0x50] sm:$0xf] %vm1447, %v1435
      %1469 = vst.msk [vmem:[%s311 + $0x54] sm:$0xf] %vm1447, %v1436
      %1470 = vst.msk [vmem:[%s311 + $0x58] sm:$0xf] %vm1447, %v1437
      %1471 = vst.msk [vmem:[%s311 + $0x5c] sm:$0xf] %vm1447, %v1438
      %1472 = vst.msk [vmem:[%s311 + $0x60] sm:$0xf] %vm1447, %v1439
      %1473 = vst.msk [vmem:[%s311 + $0x64] sm:$0xf] %vm1447, %v1440
      %1474 = vst.msk [vmem:[%s311 + $0x68] sm:$0xf] %vm1447, %v1441
      %1475 = vst.msk [vmem:[%s311 + $0x6c] sm:$0xf] %vm1447, %v1442
      %1476 = vst.msk [vmem:[%s311 + $0x70] sm:$0xf] %vm1447, %v1443
      %1477 = vst.msk [vmem:[%s311 + $0x74] sm:$0xf] %vm1447, %v1444
      %1478 = vst.msk [vmem:[%s311 + $0x78] sm:$0xf] %vm1447, %v1445
      %1479 = vst.msk [vmem:[%s311 + $0x7c] sm:$0xf] %vm1447, %v1446
      %1480 = vst [vmem:[%s314] sm:$0x1] 0.0
      %vm1481 = vcmask 57344
      %1482 = vst.msk [vmem:[%s314] sm:$0x1] %vm1481, %v1382
      %p1483 = scmp.lt.s32.totalorder %s20, 1
      %s1484 = scalar_select %p1483, %s20, 1
      %s1485 = smul.addr %s1484, 32
      %s1486 = smul.addr %s1485, 4
      %s1487 = scalar_lea.vmem %s7, %s1486
      %p1488 = scmp.lt.s32.totalorder %s20, 1
      %s1489 = scalar_select %p1488, %s20, 1
      %s1490 = scalar_lea.vmem %s8, %s1489
      // Predicated region
      $region49: #{effi_dws_conv_unit_forward.2} parent=47 // pred_check
        %p1491 = pneg %p190
      $region50: #{effi_dws_conv_unit_forward.2} parent=47 // pred_check_branch
        %1493 = sbr.rel (%p1491) target = $region52
      $region51: #{effi_dws_conv_unit_forward.2} parent=47 // pred_region
        _
      $region52: #{effi_dws_conv_unit_forward.2} parent=47 // pred_fallthru
        _
      // Predicated region
      $region53: #{effi_dws_conv_unit_forward.2} parent=47 // pred_check
        %p1494 = pneg %p216
      $region54: #{effi_dws_conv_unit_forward.2} parent=47 // pred_check_branch
        %1496 = sbr.rel (%p1494) target = $region56
      $region55: #{effi_dws_conv_unit_forward.2} parent=47 // pred_region
        _
      $region56: #{effi_dws_conv_unit_forward.2} parent=47 // pred_fallthru
        _
    $region48: #{effi_dws_conv_unit_forward.2} parent=5 // pred_fallthru
      _
    %p1497 = scmp.le.s32.totalorder 2, %s15
    // Predicated region
    $region57: #{effi_dws_conv_unit_forward.2} parent=5 // pred_check
      %p1498 = pneg %p1497
    $region58: #{effi_dws_conv_unit_forward.2} parent=5 // pred_check_branch
      %1500 = sbr.rel (%p1498) target = $region60
    $region59: #{effi_dws_conv_unit_forward.2} parent=5 // pred_region
      %s1501 = ssub.s32 %s15, 2
      // Predicated region
      $region61: #{effi_dws_conv_unit_forward.2} parent=59 // pred_check
        %p1502 = pneg %p196
      $region62: #{effi_dws_conv_unit_forward.2} parent=59 // pred_check_branch
        %1504 = sbr.rel (%p1502) target = $region64
      $region63: #{effi_dws_conv_unit_forward.2} parent=59 // pred_region
        %p1505 = scmp.lt.s32.totalorder %s21, 1
        %s1506 = scalar_select %p1505, %s21, 1
        %s1507 = smul.addr %s1506, 32
        %s1508 = smul.addr %s1507, 4
        %s1509 = scalar_lea.vmem %s7, %s1508
      $region64: #{effi_dws_conv_unit_forward.2} parent=59 // pred_fallthru
        _
      // Predicated region
      $region65: #{effi_dws_conv_unit_forward.2} parent=59 // pred_check
        %p1510 = pneg %p222
      $region66: #{effi_dws_conv_unit_forward.2} parent=59 // pred_check_branch
        %1512 = sbr.rel (%p1510) target = $region68
      $region67: #{effi_dws_conv_unit_forward.2} parent=59 // pred_region
        %p1513 = scmp.lt.s32.totalorder %s21, 1
        %s1514 = scalar_select %p1513, %s21, 1
        %s1515 = scalar_lea.vmem %s8, %s1514
      $region68: #{effi_dws_conv_unit_forward.2} parent=59 // pred_fallthru
        _
    $region60: #{effi_dws_conv_unit_forward.2} parent=5 // pred_fallthru
      _
  $region6: #{effi_dws_conv_unit_forward.2} parent=0 // loop_footer
    %s19 = sadd.s32 1, %s15
  $region7: #{effi_dws_conv_unit_forward.2} parent=0 // loop_footer_branch
    %14 = sbr.rel target = $region3
  $region8: #{effi_dws_conv_unit_forward.2} parent=0 // loop_exit
    _

</llo_original>
